<compile_context>
chip_gen: v7x
topology: tpu7x:2x2x1
jax: 0.10.0
libtpu: 0.0.40
codegen_flags: <defaults>
</compile_context>

<pallas_src>
import jax
import jax.numpy as jnp
from jax.experimental import pallas as pl
from jax.experimental.pallas import tpu as pltpu

STATE_DIM = 280
HIDDEN_DIM = 400
ACTION_DIM = 8
LEAKY_SLOPE = 0.01  # nn.LeakyReLU default negative_slope


def _round_up(v, m):
    return ((v + m - 1) // m) * m


def _cdiv(a, b):
    return (a + b - 1) // b


# Lane-padded (multiple-of-128) *output* feature dims of each layer.  The
# network input dim stays at its true value (280): W1 keeps K=280 rows, so x
# streams into the kernel untouched.
D1 = _round_up(HIDDEN_DIM, 128)        # 512
D2 = _round_up(HIDDEN_DIM // 2, 128)   # 256
D3 = _round_up(HIDDEN_DIM // 4, 128)   # 128
D4 = _round_up(ACTION_DIM, 128)        # 128

# Max batch-tile.  At TM=1024: ~1.1 MiB f32 x-tile (x2 buffers), ~0.65 MiB
# resident bf16 weights, <6 MiB f32/bf16 intermediates -> well under the
# 32 MiB scoped-VMEM limit we request (all generations have >= 64 MiB VMEM).
TM_DEFAULT = 1024
_VMEM_LIMIT = 32 * 1024 * 1024


def _leaky(h):
    # LeakyReLU with slope in (0, 1): max(h, slope*h).
    return jnp.maximum(h, LEAKY_SLOPE * h)


def agent_m2_kernel(x_ref,
                    w1_ref, b1_ref,
                    w2_ref, b2_ref,
                    w3_ref, b3_ref,
                    w4_ref, b4_ref,
                    out_ref):
    # x streams in as f32; cast to bf16 on the VPU right before the MXU.
    x = x_ref[...].astype(jnp.bfloat16)

    h1 = jnp.dot(x, w1_ref[...], preferred_element_type=jnp.float32) + b1_ref[...]
    h1 = _leaky(h1).astype(jnp.bfloat16)      # drop == identity in eval mode

    h2 = jnp.dot(h1, w2_ref[...], preferred_element_type=jnp.float32) + b2_ref[...]
    h2 = _leaky(h2).astype(jnp.bfloat16)

    h3 = jnp.dot(h2, w3_ref[...], preferred_element_type=jnp.float32) + b3_ref[...]
    h3 = _leaky(h3).astype(jnp.bfloat16)

    logits = jnp.dot(h3, w4_ref[...], preferred_element_type=jnp.float32) + b4_ref[...]
    out_ref[...] = logits.astype(out_ref.dtype)


def init_params(key, state_dim=STATE_DIM, hidden_dim=HIDDEN_DIM,
                action_dim=ACTION_DIM):
    """nn.Linear-style U(-1/sqrt(fan_in), 1/sqrt(fan_in)) init.

    Weights are returned already transposed to (in_features, out_features), f32.
    """
    dims = [(state_dim, hidden_dim),
            (hidden_dim, hidden_dim // 2),
            (hidden_dim // 2, hidden_dim // 4),
            (hidden_dim // 4, action_dim)]
    params = []
    for fan_in, fan_out in dims:
        key, kw, kb = jax.random.split(key, 3)
        bound = 1.0 / jnp.sqrt(jnp.float32(fan_in))
        w = jax.random.uniform(kw, (fan_in, fan_out), jnp.float32,
                               minval=-bound, maxval=bound)
        b = jax.random.uniform(kb, (1, fan_out), jnp.float32,
                               minval=-bound, maxval=bound)
        params += [w, b]
    return tuple(params)


def prepare_params(params):
    """Zero-pad each layer's output dim to a 128 multiple (input dims follow).

    Padding is exact: padded rows/cols are zero, so padded hidden lanes stay
    zero through bias + LeakyReLU and contribute nothing downstream.  Weights
    go to bf16 (MXU inputs), biases stay f32.
    """
    w1, b1, w2, b2, w3, b3, w4, b4 = params
    layers = [(w1, b1, STATE_DIM, D1), (w2, b2, D1, D2),
              (w3, b3, D2, D3), (w4, b4, D3, D4)]
    out = []
    for w, b, din, dout in layers:
        wp = jnp.zeros((din, dout), jnp.bfloat16)
        wp = wp.at[:w.shape[0], :w.shape[1]].set(w.astype(jnp.bfloat16))
        bp = jnp.zeros((1, dout), jnp.float32)
        bp = bp.at[:, :b.shape[1]].set(b.astype(jnp.float32))
        out += [wp, bp]
    return tuple(out)


def _pick_tile(batch, tm_max):
    # >= 2 grid steps when there's enough work so a dual-TC chip (v7x) can
    # split the "parallel" batch axis; tiles sized so trailing-block waste is
    # small; multiples of 16 (bf16 native sublane tile).
    min_blocks = 2 if batch >= 256 else 1
    n_blocks = max(_cdiv(batch, tm_max), min_blocks)
    return _round_up(_cdiv(batch, n_blocks), 16)


def agent_m2_forward(x, prepared_params, tm_max=TM_DEFAULT):
    """x: (..., STATE_DIM) float32. Returns (batch, ACTION_DIM) float32 logits."""
    x = x.reshape(-1, STATE_DIM).astype(jnp.float32)   # mirrors x.view(-1, state_dim)
    batch = x.shape[0]
    w1, b1, w2, b2, w3, b3, w4, b4 = prepared_params

    tm = _pick_tile(batch, tm_max)
    if tm > batch:
        # Tiny batch: pad rows so the single tile exactly covers the array.
        x = jnp.pad(x, ((0, tm - batch), (0, 0)))
    rows = x.shape[0]
    grid = (_cdiv(rows, tm),)              # trailing block may be partial
    covered = grid[0] * tm

    k_flops = STATE_DIM * D1 + D1 * D2 + D2 * D3 + D3 * D4
    cost = pl.CostEstimate(
        flops=int(2 * covered * k_flops),
        transcendentals=0,
        bytes_accessed=int(covered * STATE_DIM * 4           # x (f32, streamed)
                           + k_flops * 2                      # weights (bf16)
                           + (D1 + D2 + D3 + D4) * 4          # biases (f32)
                           + covered * D4 * 2),               # output (bf16)
    )

    out_p = pl.pallas_call(
        agent_m2_kernel,
        out_shape=jax.ShapeDtypeStruct((rows, D4), jnp.bfloat16),
        grid=grid,
        in_specs=[
            pl.BlockSpec((tm, STATE_DIM), lambda i: (i, 0)),   # x: streamed per tile
            pl.BlockSpec((STATE_DIM, D1), lambda i: (0, 0)),   # weights/biases: resident
            pl.BlockSpec((1, D1), lambda i: (0, 0)),
            pl.BlockSpec((D1, D2), lambda i: (0, 0)),
            pl.BlockSpec((1, D2), lambda i: (0, 0)),
            pl.BlockSpec((D2, D3), lambda i: (0, 0)),
            pl.BlockSpec((1, D3), lambda i: (0, 0)),
            pl.BlockSpec((D3, D4), lambda i: (0, 0)),
            pl.BlockSpec((1, D4), lambda i: (0, 0)),
        ],
        out_specs=pl.BlockSpec((tm, D4), lambda i: (i, 0)),
        compiler_params=pltpu.CompilerParams(
            dimension_semantics=("parallel",),
            vmem_limit_bytes=_VMEM_LIMIT),
        cost_estimate=cost,
    )(x, w1, b1, w2, b2, w3, b3, w4, b4)

    return out_p[:batch, :ACTION_DIM].astype(jnp.float32)


def reference_forward(x, params):
    """Pure-JAX f32 reference for correctness checking (unpadded params)."""
    x = x.reshape(-1, STATE_DIM).astype(jnp.float32)
    w1, b1, w2, b2, w3, b3, w4, b4 = params
    h1 = _leaky(x @ w1 + b1)
    h2 = _leaky(h1 @ w2 + b2)
    h3 = _leaky(h2 @ w3 + b3)
    return h3 @ w4 + b4


if __name__ == "__main__":
    root = jax.random.PRNGKey(0)
    root, kp, k1, k2, k3 = jax.random.split(root, 5)

    params = init_params(kp)
    prepared = prepare_params(params)

    def check(x, tm_max=TM_DEFAULT):
        out = jax.block_until_ready(agent_m2_forward(x, prepared, tm_max=tm_max))
        ref = reference_forward(x, params)
        assert out.shape == ref.shape, (out.shape, ref.shape)
        err = float(jnp.max(jnp.abs(out - ref)))
        # bf16 matmuls -> relaxed tolerance vs the f32 reference.
        assert jnp.allclose(out, ref, atol=5e-2, rtol=5e-2), err
        return out

    # Tiny batch with a leading reshape dim (single padded tile, grid=(1,)).
    check(jax.random.normal(k1, (2, 2, STATE_DIM), jnp.float32))
    # Multi-tile path where batch is NOT a multiple of the tile
    # (exercises grid > 1 and the partial trailing block).
    check(jax.random.normal(k2, (100, STATE_DIM), jnp.float32), tm_max=32)
    # batch >= 256: tile picker splits into >= 2 "parallel" grid steps (v7x 2-TC).
    check(jax.random.normal(k3, (272, STATE_DIM), jnp.float32))

    print("KERNEL_OK")
</pallas_src>

<mosaic_0001>
module attributes {stable_mosaic.version = 11 : i64} {
  func.func @agent_m2_kernel(%arg0: i32, %arg1: memref<16x280xf32, #tpu.memory_space<vmem>>, %arg2: memref<280x512xbf16, #tpu.memory_space<vmem>>, %arg3: memref<1x512xf32, #tpu.memory_space<vmem>>, %arg4: memref<512x256xbf16, #tpu.memory_space<vmem>>, %arg5: memref<1x256xf32, #tpu.memory_space<vmem>>, %arg6: memref<256x128xbf16, #tpu.memory_space<vmem>>, %arg7: memref<1x128xf32, #tpu.memory_space<vmem>>, %arg8: memref<128x128xbf16, #tpu.memory_space<vmem>>, %arg9: memref<1x128xf32, #tpu.memory_space<vmem>>, %arg10: memref<16x128xbf16, #tpu.memory_space<vmem>>) attributes {dimension_semantics = [#tpu.dimension_semantics<parallel>], iteration_bounds = array<i64: 1>, scalar_prefetch = 0 : i64, scratch_operands = 0 : i64, tpu.core_type = #tpu.core_type<tc>, window_params = [{transform_indices = @transform_0, window_bounds = array<i64: 16, 280>}, {pipeline_mode = #tpu.pipeline_mode<synchronous>, transform_indices = @transform_1, window_bounds = array<i64: 280, 512>}, {pipeline_mode = #tpu.pipeline_mode<synchronous>, transform_indices = @transform_2, window_bounds = array<i64: 1, 512>}, {pipeline_mode = #tpu.pipeline_mode<synchronous>, transform_indices = @transform_3, window_bounds = array<i64: 512, 256>}, {pipeline_mode = #tpu.pipeline_mode<synchronous>, transform_indices = @transform_4, window_bounds = array<i64: 1, 256>}, {pipeline_mode = #tpu.pipeline_mode<synchronous>, transform_indices = @transform_5, window_bounds = array<i64: 256, 128>}, {pipeline_mode = #tpu.pipeline_mode<synchronous>, transform_indices = @transform_6, window_bounds = array<i64: 1, 128>}, {pipeline_mode = #tpu.pipeline_mode<synchronous>, transform_indices = @transform_7, window_bounds = array<i64: 128, 128>}, {pipeline_mode = #tpu.pipeline_mode<synchronous>, transform_indices = @transform_8, window_bounds = array<i64: 1, 128>}, {transform_indices = @transform_9, window_bounds = array<i64: 16, 128>}]} {
    %c0 = arith.constant 0 : index
    %c0_0 = arith.constant 0 : index
    %0 = vector.load %arg1[%c0, %c0_0] : memref<16x280xf32, #tpu.memory_space<vmem>>, vector<16x280xf32>
    %1 = arith.truncf %0 : vector<16x280xf32> to vector<16x280xbf16>
    %c0_1 = arith.constant 0 : index
    %c0_2 = arith.constant 0 : index
    %2 = vector.load %arg2[%c0_1, %c0_2] : memref<280x512xbf16, #tpu.memory_space<vmem>>, vector<280x512xbf16>
    %cst = arith.constant dense<0.000000e+00> : vector<16x512xf32>
    %3 = tpu.matmul %1, %2, %cst {dimension_numbers = #tpu.dot_dimension_numbers<[1], [0], [0], [1], [0, 0, 1, 1], [], []>} : vector<16x280xbf16>, vector<280x512xbf16>, vector<16x512xf32> -> vector<16x512xf32>
    %c0_3 = arith.constant 0 : index
    %c0_4 = arith.constant 0 : index
    %4 = vector.load %arg3[%c0_3, %c0_4] : memref<1x512xf32, #tpu.memory_space<vmem>>, vector<1x512xf32>
    %5 = vector.broadcast %4 : vector<1x512xf32> to vector<16x512xf32>
    %6 = arith.addf %3, %5 : vector<16x512xf32>
    %cst_5 = arith.constant 0.00999999977 : f32
    %7 = vector.broadcast %cst_5 : f32 to vector<16x512xf32>
    %8 = arith.mulf %7, %6 : vector<16x512xf32>
    %9 = arith.maximumf %6, %8 : vector<16x512xf32>
    %10 = arith.truncf %9 : vector<16x512xf32> to vector<16x512xbf16>
    %c0_6 = arith.constant 0 : index
    %c0_7 = arith.constant 0 : index
    %11 = vector.load %arg4[%c0_6, %c0_7] : memref<512x256xbf16, #tpu.memory_space<vmem>>, vector<512x256xbf16>
    %cst_8 = arith.constant dense<0.000000e+00> : vector<16x256xf32>
    %12 = tpu.matmul %10, %11, %cst_8 {dimension_numbers = #tpu.dot_dimension_numbers<[1], [0], [0], [1], [0, 0, 1, 1], [], []>} : vector<16x512xbf16>, vector<512x256xbf16>, vector<16x256xf32> -> vector<16x256xf32>
    %c0_9 = arith.constant 0 : index
    %c0_10 = arith.constant 0 : index
    %13 = vector.load %arg5[%c0_9, %c0_10] : memref<1x256xf32, #tpu.memory_space<vmem>>, vector<1x256xf32>
    %14 = vector.broadcast %13 : vector<1x256xf32> to vector<16x256xf32>
    %15 = arith.addf %12, %14 : vector<16x256xf32>
    %cst_11 = arith.constant 0.00999999977 : f32
    %16 = vector.broadcast %cst_11 : f32 to vector<16x256xf32>
    %17 = arith.mulf %16, %15 : vector<16x256xf32>
    %18 = arith.maximumf %15, %17 : vector<16x256xf32>
    %19 = arith.truncf %18 : vector<16x256xf32> to vector<16x256xbf16>
    %c0_12 = arith.constant 0 : index
    %c0_13 = arith.constant 0 : index
    %20 = vector.load %arg6[%c0_12, %c0_13] : memref<256x128xbf16, #tpu.memory_space<vmem>>, vector<256x128xbf16>
    %cst_14 = arith.constant dense<0.000000e+00> : vector<16x128xf32>
    %21 = tpu.matmul %19, %20, %cst_14 {dimension_numbers = #tpu.dot_dimension_numbers<[1], [0], [0], [1], [0, 0, 1, 1], [], []>} : vector<16x256xbf16>, vector<256x128xbf16>, vector<16x128xf32> -> vector<16x128xf32>
    %c0_15 = arith.constant 0 : index
    %c0_16 = arith.constant 0 : index
    %22 = vector.load %arg7[%c0_15, %c0_16] : memref<1x128xf32, #tpu.memory_space<vmem>>, vector<1x128xf32>
    %23 = vector.broadcast %22 : vector<1x128xf32> to vector<16x128xf32>
    %24 = arith.addf %21, %23 : vector<16x128xf32>
    %cst_17 = arith.constant 0.00999999977 : f32
    %25 = vector.broadcast %cst_17 : f32 to vector<16x128xf32>
    %26 = arith.mulf %25, %24 : vector<16x128xf32>
    %27 = arith.maximumf %24, %26 : vector<16x128xf32>
    %28 = arith.truncf %27 : vector<16x128xf32> to vector<16x128xbf16>
    %c0_18 = arith.constant 0 : index
    %c0_19 = arith.constant 0 : index
    %29 = vector.load %arg8[%c0_18, %c0_19] : memref<128x128xbf16, #tpu.memory_space<vmem>>, vector<128x128xbf16>
    %cst_20 = arith.constant dense<0.000000e+00> : vector<16x128xf32>
    %30 = tpu.matmul %28, %29, %cst_20 {dimension_numbers = #tpu.dot_dimension_numbers<[1], [0], [0], [1], [0, 0, 1, 1], [], []>} : vector<16x128xbf16>, vector<128x128xbf16>, vector<16x128xf32> -> vector<16x128xf32>
    %c0_21 = arith.constant 0 : index
    %c0_22 = arith.constant 0 : index
    %31 = vector.load %arg9[%c0_21, %c0_22] : memref<1x128xf32, #tpu.memory_space<vmem>>, vector<1x128xf32>
    %32 = vector.broadcast %31 : vector<1x128xf32> to vector<16x128xf32>
    %33 = arith.addf %30, %32 : vector<16x128xf32>
    %34 = arith.truncf %33 : vector<16x128xf32> to vector<16x128xbf16>
    %c0_23 = arith.constant 0 : index
    %c0_24 = arith.constant 0 : index
    %35 = vector.load %arg10[%c0_23, %c0_24] : memref<16x128xbf16, #tpu.memory_space<vmem>>, vector<16x128xbf16>
    tpu.vector_store %arg10[%c0_23, %c0_24], %34 {strides = array<i32>} : memref<16x128xbf16, #tpu.memory_space<vmem>>, vector<16x128xbf16>,
    return
  }
  func.func @transform_0(%arg0: i32) -> (i32, i32) {
    %c0_i32 = arith.constant 0 : i32
    %c0_i32_0 = arith.constant 0 : i32
    return %arg0, %c0_i32 : i32, i32
  }
  func.func @transform_1(%arg0: i32) -> (i32, i32) {
    %c0_i32 = arith.constant 0 : i32
    %c0_i32_0 = arith.constant 0 : i32
    %c0_i32_1 = arith.constant 0 : i32
    return %c0_i32, %c0_i32_0 : i32, i32
  }
  func.func @transform_2(%arg0: i32) -> (i32, i32) {
    %c0_i32 = arith.constant 0 : i32
    %c0_i32_0 = arith.constant 0 : i32
    %c0_i32_1 = arith.constant 0 : i32
    return %c0_i32, %c0_i32_0 : i32, i32
  }
  func.func @transform_3(%arg0: i32) -> (i32, i32) {
    %c0_i32 = arith.constant 0 : i32
    %c0_i32_0 = arith.constant 0 : i32
    %c0_i32_1 = arith.constant 0 : i32
    return %c0_i32, %c0_i32_0 : i32, i32
  }
  func.func @transform_4(%arg0: i32) -> (i32, i32) {
    %c0_i32 = arith.constant 0 : i32
    %c0_i32_0 = arith.constant 0 : i32
    %c0_i32_1 = arith.constant 0 : i32
    return %c0_i32, %c0_i32_0 : i32, i32
  }
  func.func @transform_5(%arg0: i32) -> (i32, i32) {
    %c0_i32 = arith.constant 0 : i32
    %c0_i32_0 = arith.constant 0 : i32
    %c0_i32_1 = arith.constant 0 : i32
    return %c0_i32, %c0_i32_0 : i32, i32
  }
  func.func @transform_6(%arg0: i32) -> (i32, i32) {
    %c0_i32 = arith.constant 0 : i32
    %c0_i32_0 = arith.constant 0 : i32
    %c0_i32_1 = arith.constant 0 : i32
    return %c0_i32, %c0_i32_0 : i32, i32
  }
  func.func @transform_7(%arg0: i32) -> (i32, i32) {
    %c0_i32 = arith.constant 0 : i32
    %c0_i32_0 = arith.constant 0 : i32
    %c0_i32_1 = arith.constant 0 : i32
    return %c0_i32, %c0_i32_0 : i32, i32
  }
  func.func @transform_8(%arg0: i32) -> (i32, i32) {
    %c0_i32 = arith.constant 0 : i32
    %c0_i32_0 = arith.constant 0 : i32
    %c0_i32_1 = arith.constant 0 : i32
    return %c0_i32, %c0_i32_0 : i32, i32
  }
  func.func @transform_9(%arg0: i32) -> (i32, i32) {
    %c0_i32 = arith.constant 0 : i32
    %c0_i32_0 = arith.constant 0 : i32
    return %arg0, %c0_i32 : i32, i32
  }
}

</mosaic_0001>

<llo_original>
// kernel: tpu_custom_call.1
$region0: #{tpu_custom_call.1}
  #allocation0 [shape = 'u32[]', space=smem, size = 0x4, offset = 0x4, fixed_abs, tag = 'smem constant byte address 0x4 - core index']
  #allocation1 [shape = 'u32[144,128]{1,0:T(1,128)}', space=vmem, size = 0x12000, scoped, tag = 'internal scratch']
  %s0 = inlined_call_operand.hbm [shape: f32[16,280], index: 0, kind: input, shape index: {}]
  %s1 = inlined_call_operand.hbm [shape: bf16[280,512], index: 1, kind: input, shape index: {}]
  %s2 = inlined_call_operand.vmem [shape: f32[1,512], index: 2, kind: input, shape index: {}]
  %s3 = inlined_call_operand.hbm [shape: bf16[512,256], index: 3, kind: input, shape index: {}]
  %s4 = inlined_call_operand.vmem [shape: f32[1,256], index: 4, kind: input, shape index: {}]
  %s5 = inlined_call_operand.hbm [shape: bf16[256,128], index: 5, kind: input, shape index: {}]
  %s6 = inlined_call_operand.vmem [shape: f32[1,128], index: 6, kind: input, shape index: {}]
  %s7 = inlined_call_operand.hbm [shape: bf16[128,128], index: 7, kind: input, shape index: {}]
  %s8 = inlined_call_operand.vmem [shape: f32[1,128], index: 8, kind: input, shape index: {}]
  %s9 = inlined_call_operand.hbm [shape: bf16[16,128], index: 9, kind: output, shape index: {}]
  %s10 = sld [smem:[#allocation0]]
  $region66: #{tpu_custom_call.1} parent=0
    _
  %s12 = ssub.s32 1, %s10
  %s13 = scalar_select 0, %s12, %s10
  $region1: #{tpu_custom_call.1} parent=0
    #allocation2 [shape = 'u8[24576]{0}', space=vmem, size = 0x6000, scoped, tag = 'input window, operand 0, single buffered']
    #allocation3 [shape = 's32[1]{0}', space=sflag, size = 0x4, scoped, tag = 'scoped memory for tpu_custom_call.1']
    #allocation4 [shape = 's32[1]{0}', space=sflag, size = 0x4, scoped, tag = 'scoped memory for tpu_custom_call.1']
    #allocation5 [shape = 'u8[286720]{0}', space=vmem, size = 0x46000, scoped, tag = 'input window, operand 1, single buffered']
    #allocation6 [shape = 's32[1]{0}', space=sflag, size = 0x4, scoped, tag = 'scoped memory for tpu_custom_call.1']
    #allocation7 [shape = 'u8[262144]{0}', space=vmem, size = 0x40000, scoped, tag = 'input window, operand 3, single buffered']
    #allocation8 [shape = 'u8[65536]{0}', space=vmem, size = 0x10000, scoped, tag = 'input window, operand 5, single buffered']
    #allocation9 [shape = 's32[1]{0}', space=sflag, size = 0x4, scoped, tag = 'scoped memory for tpu_custom_call.1']
    #allocation10 [shape = 'u8[32768]{0}', space=vmem, size = 0x8000, scoped, tag = 'input window, operand 7, single buffered']
    #allocation11 [shape = 'u8[4096]{0}', space=vmem, size = 0x1000, scoped, tag = 'output window, operand 0, single buffered']
    %14 = vsyncpa [#allocation3], 0
    %15 = vsyncpa [#allocation6], 0
    %16 = vsyncpa [#allocation9], 0
    %17 = vsyncpa [#allocation4], 0
    // Predicated region
    $region2: #{tpu_custom_call.1} parent=1 // pred_check
      _
    $region3: #{tpu_custom_call.1} parent=1 // pred_check_branch
      %19 = sbr.rel (0) target = $region5
    $region4: #{tpu_custom_call.1} parent=1 // pred_region
      %s21 = ssub.s32 768, 768
      %22 = vsyncadd [#allocation3], %s21
      %s23 = sshll.u32 [#allocation2], 4
      %s24 = int_to_ptr.vmem [resolvable:$true] %s23
      %29 = dma.hbm_to_vmem [thread:$0]  %s0, 768, %s24, [#allocation3], 384, 384, 24
    $region5: #{tpu_custom_call.1} parent=1 // pred_fallthru
      _
    // Predicated region
    $region6: #{tpu_custom_call.1} parent=1 // pred_check
      _
    $region7: #{tpu_custom_call.1} parent=1 // pred_check_branch
      %31 = sbr.rel (0) target = $region9
    $region8: #{tpu_custom_call.1} parent=1 // pred_region
      %s33 = ssub.s32 8960, 8960
      %34 = vsyncadd [#allocation6], %s33
      %s35 = sshll.u32 [#allocation5], 4
      %s36 = int_to_ptr.vmem [resolvable:$true] %s35
      %41 = dma.hbm_to_vmem [thread:$0]  %s1, 8960, %s36, [#allocation6], 256, 256, 16
    $region9: #{tpu_custom_call.1} parent=1 // pred_fallthru
      _
    // Predicated region
    $region10: #{tpu_custom_call.1} parent=1 // pred_check
      _
    $region11: #{tpu_custom_call.1} parent=1 // pred_check_branch
      %43 = sbr.rel (0) target = $region13
    $region12: #{tpu_custom_call.1} parent=1 // pred_region
      _
    $region13: #{tpu_custom_call.1} parent=1 // pred_fallthru
      _
    // Predicated region
    $region14: #{tpu_custom_call.1} parent=1 // pred_check
      _
    $region15: #{tpu_custom_call.1} parent=1 // pred_check_branch
      %45 = sbr.rel (0) target = $region17
    $region16: #{tpu_custom_call.1} parent=1 // pred_region
      %s47 = ssub.s32 8192, 8192
      %48 = vsyncadd [#allocation6], %s47
      %s49 = sshll.u32 [#allocation7], 4
      %s50 = int_to_ptr.vmem [resolvable:$true] %s49
      %55 = dma.hbm_to_vmem [thread:$0]  %s3, 8192, %s50, [#allocation6], 128, 128, 8
    $region17: #{tpu_custom_call.1} parent=1 // pred_fallthru
      _
    // Predicated region
    $region18: #{tpu_custom_call.1} parent=1 // pred_check
      _
    $region19: #{tpu_custom_call.1} parent=1 // pred_check_branch
      %57 = sbr.rel (0) target = $region21
    $region20: #{tpu_custom_call.1} parent=1 // pred_region
      _
    $region21: #{tpu_custom_call.1} parent=1 // pred_fallthru
      _
    // Predicated region
    $region22: #{tpu_custom_call.1} parent=1 // pred_check
      _
    $region23: #{tpu_custom_call.1} parent=1 // pred_check_branch
      %59 = sbr.rel (0) target = $region25
    $region24: #{tpu_custom_call.1} parent=1 // pred_region
      %s61 = ssub.s32 2048, 2048
      %62 = vsyncadd [#allocation9], %s61
      %s63 = sshll.u32 [#allocation8], 4
      %s64 = int_to_ptr.vmem [resolvable:$true] %s63
      %69 = dma.hbm_to_vmem [thread:$0]  %s5, 2048, %s64, [#allocation9], 64, 64, 4
    $region25: #{tpu_custom_call.1} parent=1 // pred_fallthru
      _
    // Predicated region
    $region26: #{tpu_custom_call.1} parent=1 // pred_check
      _
    $region27: #{tpu_custom_call.1} parent=1 // pred_check_branch
      %71 = sbr.rel (0) target = $region29
    $region28: #{tpu_custom_call.1} parent=1 // pred_region
      _
    $region29: #{tpu_custom_call.1} parent=1 // pred_fallthru
      _
    // Predicated region
    $region30: #{tpu_custom_call.1} parent=1 // pred_check
      _
    $region31: #{tpu_custom_call.1} parent=1 // pred_check_branch
      %73 = sbr.rel (0) target = $region33
    $region32: #{tpu_custom_call.1} parent=1 // pred_region
      %s75 = ssub.s32 1024, 1024
      %76 = vsyncadd [#allocation9], %s75
      %s77 = sshll.u32 [#allocation10], 4
      %s78 = int_to_ptr.vmem [resolvable:$true] %s77
      %83 = dma.hbm_to_vmem [thread:$0]  %s7, 1024, %s78, [#allocation9], 64, 64, 4
    $region33: #{tpu_custom_call.1} parent=1 // pred_fallthru
      _
    // Predicated region
    $region34: #{tpu_custom_call.1} parent=1 // pred_check
      _
    $region35: #{tpu_custom_call.1} parent=1 // pred_check_branch
      %85 = sbr.rel (0) target = $region37
    $region36: #{tpu_custom_call.1} parent=1 // pred_region
      _
    $region37: #{tpu_custom_call.1} parent=1 // pred_fallthru
      _
    // Predicated region
    $region38: #{tpu_custom_call.1} parent=1 // pred_check
      _
    $region39: #{tpu_custom_call.1} parent=1 // pred_check_branch
      %87 = sbr.rel (0) target = $region41
    $region40: #{tpu_custom_call.1} parent=1 // pred_region
      %88 = dma.done [#allocation3], 768
    $region41: #{tpu_custom_call.1} parent=1 // pred_fallthru
      _
    // Predicated region
    $region42: #{tpu_custom_call.1} parent=1 // pred_check
      _
    $region43: #{tpu_custom_call.1} parent=1 // pred_check_branch
      %90 = sbr.rel (0) target = $region45
    $region44: #{tpu_custom_call.1} parent=1 // pred_region
      %91 = dma.done [#allocation6], 8960
    $region45: #{tpu_custom_call.1} parent=1 // pred_fallthru
      _
    // Predicated region
    $region46: #{tpu_custom_call.1} parent=1 // pred_check
      _
    $region47: #{tpu_custom_call.1} parent=1 // pred_check_branch
      %93 = sbr.rel (0) target = $region49
    $region48: #{tpu_custom_call.1} parent=1 // pred_region
      %94 = dma.done [#allocation6], 8192
    $region49: #{tpu_custom_call.1} parent=1 // pred_fallthru
      _
    // Predicated region
    $region50: #{tpu_custom_call.1} parent=1 // pred_check
      _
    $region51: #{tpu_custom_call.1} parent=1 // pred_check_branch
      %96 = sbr.rel (0) target = $region53
    $region52: #{tpu_custom_call.1} parent=1 // pred_region
      %97 = dma.done [#allocation9], 2048
    $region53: #{tpu_custom_call.1} parent=1 // pred_fallthru
      _
    // Predicated region
    $region54: #{tpu_custom_call.1} parent=1 // pred_check
      _
    $region55: #{tpu_custom_call.1} parent=1 // pred_check_branch
      %99 = sbr.rel (0) target = $region57
    $region56: #{tpu_custom_call.1} parent=1 // pred_region
      %100 = dma.done [#allocation9], 1024
    $region57: #{tpu_custom_call.1} parent=1 // pred_fallthru
      _
    %v102 = vld [vmem:[#allocation2] sm:$0xff]
    %v103 = vld [vmem:[#allocation2 + $0x8] sm:$0xff]
    %v104 = vld [vmem:[#allocation2 + $0x10] sm:$0xff]
    %v105 = vld [vmem:[#allocation2 + $0x18] sm:$0xff]
    %v106 = vld [vmem:[#allocation2 + $0x20] sm:$0xff]
    %v107 = vld [vmem:[#allocation2 + $0x28] sm:$0xff]
    %v108 = vpack.c.bf16 %v105, %v102
    %v109 = vpack.c.bf16 %v106, %v103
    %v110 = vpack.c.bf16 %v107, %v104
    %v111 = vld [vmem:[#allocation5] sm:$0xff]
    %v112 = vld [vmem:[#allocation5 + $0x8] sm:$0xff]
    %v113 = vld [vmem:[#allocation5 + $0x10] sm:$0xff]
    %v114 = vld [vmem:[#allocation5 + $0x18] sm:$0xff]
    %v115 = vld [vmem:[#allocation5 + $0x20] sm:$0xff]
    %v116 = vld [vmem:[#allocation5 + $0x28] sm:$0xff]
    %v117 = vld [vmem:[#allocation5 + $0x30] sm:$0xff]
    %v118 = vld [vmem:[#allocation5 + $0x38] sm:$0xff]
    %v119 = vld [vmem:[#allocation5 + $0x40] sm:$0xff]
    %v120 = vld [vmem:[#allocation5 + $0x48] sm:$0xff]
    %v121 = vld [vmem:[#allocation5 + $0x50] sm:$0xff]
    %v122 = vld [vmem:[#allocation5 + $0x58] sm:$0xff]
    %v123 = vld [vmem:[#allocation5 + $0x60] sm:$0xff]
    %v124 = vld [vmem:[#allocation5 + $0x68] sm:$0xff]
    %v125 = vld [vmem:[#allocation5 + $0x70] sm:$0xff]
    %v126 = vld [vmem:[#allocation5 + $0x78] sm:$0xff]
    %v127 = vld [vmem:[#allocation5 + $0x80] sm:$0xff]
    %v128 = vld [vmem:[#allocation5 + $0x88] sm:$0xff]
    %v129 = vld [vmem:[#allocation5 + $0x90] sm:$0xff]
    %v130 = vld [vmem:[#allocation5 + $0x98] sm:$0xff]
    %v131 = vld [vmem:[#allocation5 + $0xa0] sm:$0xff]
    %v132 = vld [vmem:[#allocation5 + $0xa8] sm:$0xff]
    %v133 = vld [vmem:[#allocation5 + $0xb0] sm:$0xff]
    %v134 = vld [vmem:[#allocation5 + $0xb8] sm:$0xff]
    %v135 = vld [vmem:[#allocation5 + $0xc0] sm:$0xff]
    %v136 = vld [vmem:[#allocation5 + $0xc8] sm:$0xff]
    %v137 = vld [vmem:[#allocation5 + $0xd0] sm:$0xff]
    %v138 = vld [vmem:[#allocation5 + $0xd8] sm:$0xff]
    %v139 = vld [vmem:[#allocation5 + $0xe0] sm:$0xff]
    %v140 = vld [vmem:[#allocation5 + $0xe8] sm:$0xff]
    %v141 = vld [vmem:[#allocation5 + $0xf0] sm:$0xff]
    %v142 = vld [vmem:[#allocation5 + $0xf8] sm:$0xff]
    %v143 = vld [vmem:[#allocation5 + $0x100] sm:$0xff]
    %v144 = vld [vmem:[#allocation5 + $0x108] sm:$0xff]
    %v145 = vld [vmem:[#allocation5 + $0x110] sm:$0xff]
    %v146 = vld [vmem:[#allocation5 + $0x118] sm:$0xff]
    %v147 = vld [vmem:[#allocation5 + $0x120] sm:$0xff]
    %v148 = vld [vmem:[#allocation5 + $0x128] sm:$0xff]
    %v149 = vld [vmem:[#allocation5 + $0x130] sm:$0xff]
    %v150 = vld [vmem:[#allocation5 + $0x138] sm:$0xff]
    %v151 = vld [vmem:[#allocation5 + $0x140] sm:$0xff]
    %v152 = vld [vmem:[#allocation5 + $0x148] sm:$0xff]
    %v153 = vld [vmem:[#allocation5 + $0x150] sm:$0xff]
    %v154 = vld [vmem:[#allocation5 + $0x158] sm:$0xff]
    %v155 = vld [vmem:[#allocation5 + $0x160] sm:$0xff]
    %v156 = vld [vmem:[#allocation5 + $0x168] sm:$0xff]
    %v157 = vld [vmem:[#allocation5 + $0x170] sm:$0xff]
    %v158 = vld [vmem:[#allocation5 + $0x178] sm:$0xff]
    %v159 = vld [vmem:[#allocation5 + $0x180] sm:$0xff]
    %v160 = vld [vmem:[#allocation5 + $0x188] sm:$0xff]
    %v161 = vld [vmem:[#allocation5 + $0x190] sm:$0xff]
    %v162 = vld [vmem:[#allocation5 + $0x198] sm:$0xff]
    %v163 = vld [vmem:[#allocation5 + $0x1a0] sm:$0xff]
    %v164 = vld [vmem:[#allocation5 + $0x1a8] sm:$0xff]
    %v165 = vld [vmem:[#allocation5 + $0x1b0] sm:$0xff]
    %v166 = vld [vmem:[#allocation5 + $0x1b8] sm:$0xff]
    %v167 = vld [vmem:[#allocation5 + $0x1c0] sm:$0xff]
    %v168 = vld [vmem:[#allocation5 + $0x1c8] sm:$0xff]
    %v169 = vld [vmem:[#allocation5 + $0x1d0] sm:$0xff]
    %v170 = vld [vmem:[#allocation5 + $0x1d8] sm:$0xff]
    %v171 = vld [vmem:[#allocation5 + $0x1e0] sm:$0xff]
    %v172 = vld [vmem:[#allocation5 + $0x1e8] sm:$0xff]
    %v173 = vld [vmem:[#allocation5 + $0x1f0] sm:$0xff]
    %v174 = vld [vmem:[#allocation5 + $0x1f8] sm:$0xff]
    %v175 = vld [vmem:[#allocation5 + $0x200] sm:$0xff]
    %v176 = vld [vmem:[#allocation5 + $0x208] sm:$0xff]
    %v177 = vld [vmem:[#allocation5 + $0x210] sm:$0xff]
    %v178 = vld [vmem:[#allocation5 + $0x218] sm:$0xff]
    %v179 = vld [vmem:[#allocation5 + $0x220] sm:$0xff]
    %v180 = vld [vmem:[#allocation5 + $0x228] sm:$0xff]
    %v181 = vld [vmem:[%s2] sm:$0xf]
    %v183 = vlaneseq
    %v184 = vshrl.u32 %v183, 7
    %v185 = vsub.s32 0, %v184
    %v186 = vrot.slane %v181, %v185
    %v187 = vlaneseq
    %v188 = vshrl.u32 %v187, 7
    %v189 = vsub.s32 1, %v188
    %v190 = vrot.slane %v181, %v189
    %v191 = vlaneseq
    %v192 = vshrl.u32 %v191, 7
    %v193 = vsub.s32 2, %v192
    %v194 = vrot.slane %v181, %v193
    %v195 = vlaneseq
    %v196 = vshrl.u32 %v195, 7
    %v197 = vsub.s32 3, %v196
    %v198 = vrot.slane %v181, %v197
    %v273 = vunpack.c.l.b16 %v111
    %v274 = vunpack.c.h.b16 %v111
    %v275 = vunpack.c.l.b16 %v112
    %v276 = vunpack.c.h.b16 %v112
    %v277 = vunpack.c.l.b16 %v113
    %v278 = vunpack.c.h.b16 %v113
    %v279 = vunpack.c.l.b16 %v114
    %v280 = vunpack.c.h.b16 %v114
    %v281 = vunpack.c.l.b16 %v115
    %v282 = vunpack.c.h.b16 %v115
    %v283 = vunpack.c.l.b16 %v116
    %v284 = vunpack.c.h.b16 %v116
    %v285 = vunpack.c.l.b16 %v117
    %v286 = vunpack.c.h.b16 %v117
    %v287 = vunpack.c.l.b16 %v118
    %v288 = vunpack.c.h.b16 %v118
    %v289 = vunpack.c.l.b16 %v119
    %v290 = vunpack.c.h.b16 %v119
    %v291 = vunpack.c.l.b16 %v120
    %v292 = vunpack.c.h.b16 %v120
    %v293 = vunpack.c.l.b16 %v121
    %v294 = vunpack.c.h.b16 %v121
    %v295 = vunpack.c.l.b16 %v122
    %v296 = vunpack.c.h.b16 %v122
    %v297 = vunpack.c.l.b16 %v123
    %v298 = vunpack.c.h.b16 %v123
    %v299 = vunpack.c.l.b16 %v124
    %v300 = vunpack.c.h.b16 %v124
    %v301 = vunpack.c.l.b16 %v125
    %v302 = vunpack.c.h.b16 %v125
    %v303 = vunpack.c.l.b16 %v126
    %v304 = vunpack.c.h.b16 %v126
    %v305 = vunpack.c.l.b16 %v127
    %v306 = vunpack.c.h.b16 %v127
    %v307 = vunpack.c.l.b16 %v128
    %v308 = vunpack.c.h.b16 %v128
    %v309 = vunpack.c.l.b16 %v129
    %v310 = vunpack.c.h.b16 %v129
    %v311 = vunpack.c.l.b16 %v130
    %v312 = vunpack.c.h.b16 %v130
    %v313 = vunpack.c.l.b16 %v131
    %v314 = vunpack.c.h.b16 %v131
    %v315 = vunpack.c.l.b16 %v132
    %v316 = vunpack.c.h.b16 %v132
    %v317 = vunpack.c.l.b16 %v133
    %v318 = vunpack.c.h.b16 %v133
    %v319 = vunpack.c.l.b16 %v134
    %v320 = vunpack.c.h.b16 %v134
    %v321 = vunpack.c.l.b16 %v135
    %v322 = vunpack.c.h.b16 %v135
    %v323 = vunpack.c.l.b16 %v136
    %v324 = vunpack.c.h.b16 %v136
    %v325 = vunpack.c.l.b16 %v137
    %v326 = vunpack.c.h.b16 %v137
    %v327 = vunpack.c.l.b16 %v138
    %v328 = vunpack.c.h.b16 %v138
    %v329 = vunpack.c.l.b16 %v139
    %v330 = vunpack.c.h.b16 %v139
    %v331 = vunpack.c.l.b16 %v140
    %v332 = vunpack.c.h.b16 %v140
    %v333 = vunpack.c.l.b16 %v141
    %v334 = vunpack.c.h.b16 %v141
    %v335 = vunpack.c.l.b16 %v142
    %v336 = vunpack.c.h.b16 %v142
    %v337 = vunpack.c.l.b16 %v143
    %v338 = vunpack.c.h.b16 %v143
    %v339 = vunpack.c.l.b16 %v144
    %v340 = vunpack.c.h.b16 %v144
    %v341 = vunpack.c.l.b16 %v145
    %v342 = vunpack.c.h.b16 %v145
    %v343 = vunpack.c.l.b16 %v146
    %v344 = vunpack.c.h.b16 %v146
    %v345 = vunpack.c.l.b16 %v147
    %v346 = vunpack.c.h.b16 %v147
    %v347 = vunpack.c.l.b16 %v148
    %v348 = vunpack.c.h.b16 %v148
    %v349 = vunpack.c.l.b16 %v149
    %v350 = vunpack.c.h.b16 %v149
    %v351 = vunpack.c.l.b16 %v150
    %v352 = vunpack.c.h.b16 %v150
    %v353 = vunpack.c.l.b16 %v151
    %v354 = vunpack.c.h.b16 %v151
    %v355 = vunpack.c.l.b16 %v152
    %v356 = vunpack.c.h.b16 %v152
    %v357 = vunpack.c.l.b16 %v153
    %v358 = vunpack.c.h.b16 %v153
    %v359 = vunpack.c.l.b16 %v154
    %v360 = vunpack.c.h.b16 %v154
    %v361 = vunpack.c.l.b16 %v155
    %v362 = vunpack.c.h.b16 %v155
    %v363 = vunpack.c.l.b16 %v156
    %v364 = vunpack.c.h.b16 %v156
    %v365 = vunpack.c.l.b16 %v157
    %v366 = vunpack.c.h.b16 %v157
    %v367 = vunpack.c.l.b16 %v158
    %v368 = vunpack.c.h.b16 %v158
    %v369 = vunpack.c.l.b16 %v159
    %v370 = vunpack.c.h.b16 %v159
    %v371 = vunpack.c.l.b16 %v160
    %v372 = vunpack.c.h.b16 %v160
    %v373 = vunpack.c.l.b16 %v161
    %v374 = vunpack.c.h.b16 %v161
    %v375 = vunpack.c.l.b16 %v162
    %v376 = vunpack.c.h.b16 %v162
    %v377 = vunpack.c.l.b16 %v163
    %v378 = vunpack.c.h.b16 %v163
    %v379 = vunpack.c.l.b16 %v164
    %v380 = vunpack.c.h.b16 %v164
    %v381 = vunpack.c.l.b16 %v165
    %v382 = vunpack.c.h.b16 %v165
    %v383 = vunpack.c.l.b16 %v166
    %v384 = vunpack.c.h.b16 %v166
    %v385 = vunpack.c.l.b16 %v167
    %v386 = vunpack.c.h.b16 %v167
    %v387 = vunpack.c.l.b16 %v168
    %v388 = vunpack.c.h.b16 %v168
    %v389 = vunpack.c.l.b16 %v169
    %v390 = vunpack.c.h.b16 %v169
    %v391 = vunpack.c.l.b16 %v170
    %v392 = vunpack.c.h.b16 %v170
    %v393 = vunpack.c.l.b16 %v171
    %v394 = vunpack.c.h.b16 %v171
    %v395 = vunpack.c.l.b16 %v172
    %v396 = vunpack.c.h.b16 %v172
    %v397 = vunpack.c.l.b16 %v173
    %v398 = vunpack.c.h.b16 %v173
    %v399 = vunpack.c.l.b16 %v174
    %v400 = vunpack.c.h.b16 %v174
    %v401 = vunpack.c.l.b16 %v175
    %v402 = vunpack.c.h.b16 %v175
    %v403 = vunpack.c.l.b16 %v176
    %v404 = vunpack.c.h.b16 %v176
    %v405 = vunpack.c.l.b16 %v177
    %v406 = vunpack.c.h.b16 %v177
    %v407 = vunpack.c.l.b16 %v178
    %v408 = vunpack.c.h.b16 %v178
    %v409 = vunpack.c.l.b16 %v179
    %v410 = vunpack.c.h.b16 %v179
    %v411 = vunpack.c.l.b16 %v180
    %v412 = vunpack.c.h.b16 %v180
    %v413 = vpack.c.b16 %v277, %v273
    %v414 = vpack.c.b16 %v278, %v274
    %v415 = vpack.c.b16 %v279, %v275
    %v416 = vpack.c.b16 %v280, %v276
    %v417 = vpack.c.b16 %v285, %v281
    %v418 = vpack.c.b16 %v286, %v282
    %v419 = vpack.c.b16 %v287, %v283
    %v420 = vpack.c.b16 %v288, %v284
    %v421 = vpack.c.b16 %v293, %v289
    %v422 = vpack.c.b16 %v294, %v290
    %v423 = vpack.c.b16 %v295, %v291
    %v424 = vpack.c.b16 %v296, %v292
    %v425 = vpack.c.b16 %v301, %v297
    %v426 = vpack.c.b16 %v302, %v298
    %v427 = vpack.c.b16 %v303, %v299
    %v428 = vpack.c.b16 %v304, %v300
    %v429 = vpack.c.b16 %v309, %v305
    %v430 = vpack.c.b16 %v310, %v306
    %v431 = vpack.c.b16 %v311, %v307
    %v432 = vpack.c.b16 %v312, %v308
    %v433 = vpack.c.b16 %v317, %v313
    %v434 = vpack.c.b16 %v318, %v314
    %v435 = vpack.c.b16 %v319, %v315
    %v436 = vpack.c.b16 %v320, %v316
    %v437 = vpack.c.b16 %v325, %v321
    %v438 = vpack.c.b16 %v326, %v322
    %v439 = vpack.c.b16 %v327, %v323
    %v440 = vpack.c.b16 %v328, %v324
    %v441 = vpack.c.b16 %v333, %v329
    %v442 = vpack.c.b16 %v334, %v330
    %v443 = vpack.c.b16 %v335, %v331
    %v444 = vpack.c.b16 %v336, %v332
    %v445 = vpack.c.b16 %v341, %v337
    %v446 = vpack.c.b16 %v342, %v338
    %v447 = vpack.c.b16 %v343, %v339
    %v448 = vpack.c.b16 %v344, %v340
    %v449 = vpack.c.b16 %v349, %v345
    %v450 = vpack.c.b16 %v350, %v346
    %v451 = vpack.c.b16 %v351, %v347
    %v452 = vpack.c.b16 %v352, %v348
    %v453 = vpack.c.b16 %v357, %v353
    %v454 = vpack.c.b16 %v358, %v354
    %v455 = vpack.c.b16 %v359, %v355
    %v456 = vpack.c.b16 %v360, %v356
    %v457 = vpack.c.b16 %v365, %v361
    %v458 = vpack.c.b16 %v366, %v362
    %v459 = vpack.c.b16 %v367, %v363
    %v460 = vpack.c.b16 %v368, %v364
    %v461 = vpack.c.b16 %v373, %v369
    %v462 = vpack.c.b16 %v374, %v370
    %v463 = vpack.c.b16 %v375, %v371
    %v464 = vpack.c.b16 %v376, %v372
    %v465 = vpack.c.b16 %v381, %v377
    %v466 = vpack.c.b16 %v382, %v378
    %v467 = vpack.c.b16 %v383, %v379
    %v468 = vpack.c.b16 %v384, %v380
    %v469 = vpack.c.b16 %v389, %v385
    %v470 = vpack.c.b16 %v390, %v386
    %v471 = vpack.c.b16 %v391, %v387
    %v472 = vpack.c.b16 %v392, %v388
    %v473 = vpack.c.b16 %v397, %v393
    %v474 = vpack.c.b16 %v398, %v394
    %v475 = vpack.c.b16 %v399, %v395
    %v476 = vpack.c.b16 %v400, %v396
    %v477 = vpack.c.b16 %v405, %v401
    %v478 = vpack.c.b16 %v406, %v402
    %v479 = vpack.c.b16 %v407, %v403
    %v480 = vpack.c.b16 %v408, %v404
    %v481 = vpack.c.b16 %v409, %v409
    %v482 = vpack.c.b16 %v410, %v410
    %v483 = vpack.c.b16 %v411, %v411
    %v484 = vpack.c.b16 %v412, %v412
    %vm553 = vcmask 195584
    %v555 = vsel %vm553, %v110, 0
    %vm557 = vcmask 1043456
    %v559 = vsel %vm557, %v481, 0
    %v562 = vsel %vm557, %v482, 0
    %v565 = vsel %vm557, %v483, 0
    %v568 = vsel %vm557, %v484, 0
    %570 = vmatprep.subr.bf16.mxu0 %v414
    %571 = vmatpush1.bf16.msra.mxu0 %v413
    %572 = vmatprep.subr.bf16.mxu0 %v418
    %573 = vmatpush1.bf16.msra.mxu0 %v417
    %574 = vmatprep.subr.bf16.mxu0 %v422
    %575 = vmatpush1.bf16.msra.mxu0 %v421
    %576 = vmatprep.subr.bf16.mxu0 %v426
    %577 = vmatpush1.bf16.msra.mxu0 %v425
    %578 = vmatprep.subr.bf16.mxu0 %v430
    %579 = vmatpush1.bf16.msra.mxu0 %v429
    %580 = vmatprep.subr.bf16.mxu0 %v434
    %581 = vmatpush1.bf16.msra.mxu0 %v433
    %582 = vmatprep.subr.bf16.mxu0 %v438
    %583 = vmatpush1.bf16.msra.mxu0 %v437
    %584 = vmatprep.subr.bf16.mxu0 %v442
    %585 = vmatpush1.bf16.msra.mxu0 %v441
    %586 = vmatprep.subr.bf16.mxu0 %v446
    %587 = vmatpush1.bf16.msra.mxu0 %v445
    %588 = vmatprep.subr.bf16.mxu0 %v450
    %589 = vmatpush1.bf16.msra.mxu0 %v449
    %590 = vmatprep.subr.bf16.mxu0 %v454
    %591 = vmatpush1.bf16.msra.mxu0 %v453
    %592 = vmatprep.subr.bf16.mxu0 %v458
    %593 = vmatpush1.bf16.msra.mxu0 %v457
    %594 = vmatprep.subr.bf16.mxu0 %v462
    %595 = vmatpush1.bf16.msra.mxu0 %v461
    %596 = vmatprep.subr.bf16.mxu0 %v466
    %597 = vmatpush1.bf16.msra.mxu0 %v465
    %598 = vmatprep.subr.bf16.mxu0 %v470
    %599 = vmatpush1.bf16.msra.mxu0 %v469
    %600 = vmatprep.subr.bf16.mxu0 %v474
    %601 = vmatpush1.bf16.msra.mxu0 %v473
    %602 = vmatprep.mubr.bf16.mxu0 %v109
    %603 = vmatmul.mubr.bf16.gmra.mrb[0].mxu0 %v108
    %v604 = vpop.f32.mrb[0].mxu0
    %v605 = vadd.f32 %v186, %v604
    %v606 = vpop.f32.mrb[0].mxu0
    %v607 = vadd.f32 %v190, %v606
    %v608 = vpop.f32.mrb[0].mxu0
    %v609 = vadd.f32 %v186, %v608
    %v610 = vpop.f32.mrb[0].mxu0
    %v611 = vadd.f32 %v190, %v610
    %612 = vdwg.mxu0
    %613 = vmatprep.subr.bf16.mxu0 %v478
    %614 = vmatpush1.bf16.msra.mxu0 %v477
    %615 = vmatprep.subr.bf16.mxu0 %v562
    %616 = vmatpush1.bf16.msra.mxu0 %v559
    %617 = vmatprep.subr.bf16.mxu0 0
    %618 = vmatpush1.bf16.msra.mxu0 0
    %619 = vmatprep.subr.bf16.mxu0 0
    %620 = vmatpush1.bf16.msra.mxu0 0
    %621 = vmatprep.subr.bf16.mxu0 0
    %622 = vmatpush1.bf16.msra.mxu0 0
    %623 = vmatprep.subr.bf16.mxu0 0
    %624 = vmatpush1.bf16.msra.mxu0 0
    %625 = vmatprep.subr.bf16.mxu0 0
    %626 = vmatpush1.bf16.msra.mxu0 0
    %627 = vmatprep.subr.bf16.mxu0 0
    %628 = vmatpush1.bf16.msra.mxu0 0
    %629 = vmatprep.subr.bf16.mxu0 0
    %630 = vmatpush1.bf16.msra.mxu0 0
    %631 = vmatprep.subr.bf16.mxu0 0
    %632 = vmatpush1.bf16.msra.mxu0 0
    %633 = vmatprep.subr.bf16.mxu0 0
    %634 = vmatpush1.bf16.msra.mxu0 0
    %635 = vmatprep.subr.bf16.mxu0 0
    %636 = vmatpush1.bf16.msra.mxu0 0
    %637 = vmatprep.subr.bf16.mxu0 0
    %638 = vmatpush1.bf16.msra.mxu0 0
    %639 = vmatprep.subr.bf16.mxu0 0
    %640 = vmatpush1.bf16.msra.mxu0 0
    %641 = vmatprep.subr.bf16.mxu0 0
    %642 = vmatpush1.bf16.msra.mxu0 0
    %643 = vmatprep.subr.bf16.mxu0 0
    %644 = vmatpush1.bf16.msra.mxu0 0
    %645 = vmatprep.mubr.bf16.mxu0 0
    %646 = vmatmul.mubr.bf16.gmra.mrb[0].mxu0 %v555
    %v647 = vpop.f32.mrb[0].mxu0
    %v648 = vadd.f32 %v605, %v647
    %v649 = vpop.f32.mrb[0].mxu0
    %v650 = vadd.f32 %v607, %v649
    %v651 = vpop.f32.mrb[0].mxu0
    %v652 = vadd.f32 %v609, %v651
    %v653 = vpop.f32.mrb[0].mxu0
    %v654 = vadd.f32 %v611, %v653
    %655 = vdwg.mxu0
    %656 = vmatprep.subr.bf16.mxu0 %v416
    %657 = vmatpush1.bf16.msra.mxu0 %v415
    %658 = vmatprep.subr.bf16.mxu0 %v420
    %659 = vmatpush1.bf16.msra.mxu0 %v419
    %660 = vmatprep.subr.bf16.mxu0 %v424
    %661 = vmatpush1.bf16.msra.mxu0 %v423
    %662 = vmatprep.subr.bf16.mxu0 %v428
    %663 = vmatpush1.bf16.msra.mxu0 %v427
    %664 = vmatprep.subr.bf16.mxu0 %v432
    %665 = vmatpush1.bf16.msra.mxu0 %v431
    %666 = vmatprep.subr.bf16.mxu0 %v436
    %667 = vmatpush1.bf16.msra.mxu0 %v435
    %668 = vmatprep.subr.bf16.mxu0 %v440
    %669 = vmatpush1.bf16.msra.mxu0 %v439
    %670 = vmatprep.subr.bf16.mxu0 %v444
    %671 = vmatpush1.bf16.msra.mxu0 %v443
    %672 = vmatprep.subr.bf16.mxu0 %v448
    %673 = vmatpush1.bf16.msra.mxu0 %v447
    %674 = vmatprep.subr.bf16.mxu0 %v452
    %675 = vmatpush1.bf16.msra.mxu0 %v451
    %676 = vmatprep.subr.bf16.mxu0 %v456
    %677 = vmatpush1.bf16.msra.mxu0 %v455
    %678 = vmatprep.subr.bf16.mxu0 %v460
    %679 = vmatpush1.bf16.msra.mxu0 %v459
    %680 = vmatprep.subr.bf16.mxu0 %v464
    %681 = vmatpush1.bf16.msra.mxu0 %v463
    %682 = vmatprep.subr.bf16.mxu0 %v468
    %683 = vmatpush1.bf16.msra.mxu0 %v467
    %684 = vmatprep.subr.bf16.mxu0 %v472
    %685 = vmatpush1.bf16.msra.mxu0 %v471
    %686 = vmatprep.subr.bf16.mxu0 %v476
    %687 = vmatpush1.bf16.msra.mxu0 %v475
    %688 = vmatprep.mubr.bf16.mxu0 %v109
    %689 = vmatmul.mubr.bf16.gmra.mrb[0].mxu0 %v108
    %v690 = vpop.f32.mrb[0].mxu0
    %v691 = vadd.f32 %v194, %v690
    %v692 = vpop.f32.mrb[0].mxu0
    %v693 = vadd.f32 %v198, %v692
    %v694 = vpop.f32.mrb[0].mxu0
    %v695 = vadd.f32 %v194, %v694
    %v696 = vpop.f32.mrb[0].mxu0
    %v697 = vadd.f32 %v198, %v696
    %698 = vdwg.mxu0
    %699 = vmatprep.subr.bf16.mxu0 %v480
    %700 = vmatpush1.bf16.msra.mxu0 %v479
    %701 = vmatprep.subr.bf16.mxu0 %v568
    %702 = vmatpush1.bf16.msra.mxu0 %v565
    %703 = vmatprep.subr.bf16.mxu0 0
    %704 = vmatpush1.bf16.msra.mxu0 0
    %705 = vmatprep.subr.bf16.mxu0 0
    %706 = vmatpush1.bf16.msra.mxu0 0
    %707 = vmatprep.subr.bf16.mxu0 0
    %708 = vmatpush1.bf16.msra.mxu0 0
    %709 = vmatprep.subr.bf16.mxu0 0
    %710 = vmatpush1.bf16.msra.mxu0 0
    %711 = vmatprep.subr.bf16.mxu0 0
    %712 = vmatpush1.bf16.msra.mxu0 0
    %713 = vmatprep.subr.bf16.mxu0 0
    %714 = vmatpush1.bf16.msra.mxu0 0
    %715 = vmatprep.subr.bf16.mxu0 0
    %716 = vmatpush1.bf16.msra.mxu0 0
    %717 = vmatprep.subr.bf16.mxu0 0
    %718 = vmatpush1.bf16.msra.mxu0 0
    %719 = vmatprep.subr.bf16.mxu0 0
    %720 = vmatpush1.bf16.msra.mxu0 0
    %721 = vmatprep.subr.bf16.mxu0 0
    %722 = vmatpush1.bf16.msra.mxu0 0
    %723 = vmatprep.subr.bf16.mxu0 0
    %724 = vmatpush1.bf16.msra.mxu0 0
    %725 = vmatprep.subr.bf16.mxu0 0
    %726 = vmatpush1.bf16.msra.mxu0 0
    %727 = vmatprep.subr.bf16.mxu0 0
    %728 = vmatpush1.bf16.msra.mxu0 0
    %729 = vmatprep.subr.bf16.mxu0 0
    %730 = vmatpush1.bf16.msra.mxu0 0
    %731 = vmatprep.mubr.bf16.mxu0 0
    %732 = vmatmul.mubr.bf16.gmra.mrb[0].mxu0 %v555
    %v733 = vpop.f32.mrb[0].mxu0
    %v734 = vadd.f32 %v691, %v733
    %v735 = vpop.f32.mrb[0].mxu0
    %v736 = vadd.f32 %v693, %v735
    %v737 = vpop.f32.mrb[0].mxu0
    %v738 = vadd.f32 %v695, %v737
    %v739 = vpop.f32.mrb[0].mxu0
    %v740 = vadd.f32 %v697, %v739
    %741 = vdwg.mxu0
    %v742 = vmul.f32 %v648, 0.01
    %v743 = vmul.f32 %v650, 0.01
    %v744 = vmul.f32 %v734, 0.01
    %v745 = vmul.f32 %v736, 0.01
    %v746 = vmul.f32 %v652, 0.01
    %v747 = vmul.f32 %v654, 0.01
    %v748 = vmul.f32 %v738, 0.01
    %v749 = vmul.f32 %v740, 0.01
    %v750 = vmax.f32 %v648, %v742
    %v751 = vmax.f32 %v650, %v743
    %v752 = vmax.f32 %v734, %v744
    %v753 = vmax.f32 %v736, %v745
    %v754 = vmax.f32 %v652, %v746
    %v755 = vmax.f32 %v654, %v747
    %v756 = vmax.f32 %v738, %v748
    %v757 = vmax.f32 %v740, %v749
    %v758 = vpack.c.bf16 %v754, %v750
    %v759 = vpack.c.bf16 %v755, %v751
    %v760 = vpack.c.bf16 %v756, %v752
    %v761 = vpack.c.bf16 %v757, %v753
    %v762 = vld [vmem:[#allocation7] sm:$0xff]
    %v763 = vld [vmem:[#allocation7 + $0x8] sm:$0xff]
    %v764 = vld [vmem:[#allocation7 + $0x10] sm:$0xff]
    %v765 = vld [vmem:[#allocation7 + $0x18] sm:$0xff]
    %v766 = vld [vmem:[#allocation7 + $0x20] sm:$0xff]
    %v767 = vld [vmem:[#allocation7 + $0x28] sm:$0xff]
    %v768 = vld [vmem:[#allocation7 + $0x30] sm:$0xff]
    %v769 = vld [vmem:[#allocation7 + $0x38] sm:$0xff]
    %v770 = vld [vmem:[#allocation7 + $0x40] sm:$0xff]
    %v771 = vld [vmem:[#allocation7 + $0x48] sm:$0xff]
    %v772 = vld [vmem:[#allocation7 + $0x50] sm:$0xff]
    %v773 = vld [vmem:[#allocation7 + $0x58] sm:$0xff]
    %v774 = vld [vmem:[#allocation7 + $0x60] sm:$0xff]
    %v775 = vld [vmem:[#allocation7 + $0x68] sm:$0xff]
    %v776 = vld [vmem:[#allocation7 + $0x70] sm:$0xff]
    %v777 = vld [vmem:[#allocation7 + $0x78] sm:$0xff]
    %v778 = vld [vmem:[#allocation7 + $0x80] sm:$0xff]
    %v779 = vld [vmem:[#allocation7 + $0x88] sm:$0xff]
    %v780 = vld [vmem:[#allocation7 + $0x90] sm:$0xff]
    %v781 = vld [vmem:[#allocation7 + $0x98] sm:$0xff]
    %v782 = vld [vmem:[#allocation7 + $0xa0] sm:$0xff]
    %v783 = vld [vmem:[#allocation7 + $0xa8] sm:$0xff]
    %v784 = vld [vmem:[#allocation7 + $0xb0] sm:$0xff]
    %v785 = vld [vmem:[#allocation7 + $0xb8] sm:$0xff]
    %v786 = vld [vmem:[#allocation7 + $0xc0] sm:$0xff]
    %v787 = vld [vmem:[#allocation7 + $0xc8] sm:$0xff]
    %v788 = vld [vmem:[#allocation7 + $0xd0] sm:$0xff]
    %v789 = vld [vmem:[#allocation7 + $0xd8] sm:$0xff]
    %v790 = vld [vmem:[#allocation7 + $0xe0] sm:$0xff]
    %v791 = vld [vmem:[#allocation7 + $0xe8] sm:$0xff]
    %v792 = vld [vmem:[#allocation7 + $0xf0] sm:$0xff]
    %v793 = vld [vmem:[#allocation7 + $0xf8] sm:$0xff]
    %v794 = vld [vmem:[#allocation7 + $0x100] sm:$0xff]
    %v795 = vld [vmem:[#allocation7 + $0x108] sm:$0xff]
    %v796 = vld [vmem:[#allocation7 + $0x110] sm:$0xff]
    %v797 = vld [vmem:[#allocation7 + $0x118] sm:$0xff]
    %v798 = vld [vmem:[#allocation7 + $0x120] sm:$0xff]
    %v799 = vld [vmem:[#allocation7 + $0x128] sm:$0xff]
    %v800 = vld [vmem:[#allocation7 + $0x130] sm:$0xff]
    %v801 = vld [vmem:[#allocation7 + $0x138] sm:$0xff]
    %v802 = vld [vmem:[#allocation7 + $0x140] sm:$0xff]
    %v803 = vld [vmem:[#allocation7 + $0x148] sm:$0xff]
    %v804 = vld [vmem:[#allocation7 + $0x150] sm:$0xff]
    %v805 = vld [vmem:[#allocation7 + $0x158] sm:$0xff]
    %v806 = vld [vmem:[#allocation7 + $0x160] sm:$0xff]
    %v807 = vld [vmem:[#allocation7 + $0x168] sm:$0xff]
    %v808 = vld [vmem:[#allocation7 + $0x170] sm:$0xff]
    %v809 = vld [vmem:[#allocation7 + $0x178] sm:$0xff]
    %v810 = vld [vmem:[#allocation7 + $0x180] sm:$0xff]
    %v811 = vld [vmem:[#allocation7 + $0x188] sm:$0xff]
    %v812 = vld [vmem:[#allocation7 + $0x190] sm:$0xff]
    %v813 = vld [vmem:[#allocation7 + $0x198] sm:$0xff]
    %v814 = vld [vmem:[#allocation7 + $0x1a0] sm:$0xff]
    %v815 = vld [vmem:[#allocation7 + $0x1a8] sm:$0xff]
    %v816 = vld [vmem:[#allocation7 + $0x1b0] sm:$0xff]
    %v817 = vld [vmem:[#allocation7 + $0x1b8] sm:$0xff]
    %v818 = vld [vmem:[#allocation7 + $0x1c0] sm:$0xff]
    %v819 = vld [vmem:[#allocation7 + $0x1c8] sm:$0xff]
    %v820 = vld [vmem:[#allocation7 + $0x1d0] sm:$0xff]
    %v821 = vld [vmem:[#allocation7 + $0x1d8] sm:$0xff]
    %v822 = vld [vmem:[#allocation7 + $0x1e0] sm:$0xff]
    %v823 = vld [vmem:[#allocation7 + $0x1e8] sm:$0xff]
    %v824 = vld [vmem:[#allocation7 + $0x1f0] sm:$0xff]
    %v825 = vld [vmem:[#allocation7 + $0x1f8] sm:$0xff]
    %v826 = vld [vmem:[%s4] sm:$0x3]
    %v828 = vlaneseq
    %v829 = vshrl.u32 %v828, 7
    %v830 = vsub.s32 0, %v829
    %v831 = vrot.slane %v826, %v830
    %v832 = vlaneseq
    %v833 = vshrl.u32 %v832, 7
    %v834 = vsub.s32 1, %v833
    %v835 = vrot.slane %v826, %v834
    %v902 = vunpack.c.l.b16 %v762
    %v903 = vunpack.c.h.b16 %v762
    %v904 = vunpack.c.l.b16 %v763
    %v905 = vunpack.c.h.b16 %v763
    %v906 = vunpack.c.l.b16 %v764
    %v907 = vunpack.c.h.b16 %v764
    %v908 = vunpack.c.l.b16 %v765
    %v909 = vunpack.c.h.b16 %v765
    %v910 = vunpack.c.l.b16 %v766
    %v911 = vunpack.c.h.b16 %v766
    %v912 = vunpack.c.l.b16 %v767
    %v913 = vunpack.c.h.b16 %v767
    %v914 = vunpack.c.l.b16 %v768
    %v915 = vunpack.c.h.b16 %v768
    %v916 = vunpack.c.l.b16 %v769
    %v917 = vunpack.c.h.b16 %v769
    %v918 = vunpack.c.l.b16 %v770
    %v919 = vunpack.c.h.b16 %v770
    %v920 = vunpack.c.l.b16 %v771
    %v921 = vunpack.c.h.b16 %v771
    %v922 = vunpack.c.l.b16 %v772
    %v923 = vunpack.c.h.b16 %v772
    %v924 = vunpack.c.l.b16 %v773
    %v925 = vunpack.c.h.b16 %v773
    %v926 = vunpack.c.l.b16 %v774
    %v927 = vunpack.c.h.b16 %v774
    %v928 = vunpack.c.l.b16 %v775
    %v929 = vunpack.c.h.b16 %v775
    %v930 = vunpack.c.l.b16 %v776
    %v931 = vunpack.c.h.b16 %v776
    %v932 = vunpack.c.l.b16 %v777
    %v933 = vunpack.c.h.b16 %v777
    %v934 = vunpack.c.l.b16 %v778
    %v935 = vunpack.c.h.b16 %v778
    %v936 = vunpack.c.l.b16 %v779
    %v937 = vunpack.c.h.b16 %v779
    %v938 = vunpack.c.l.b16 %v780
    %v939 = vunpack.c.h.b16 %v780
    %v940 = vunpack.c.l.b16 %v781
    %v941 = vunpack.c.h.b16 %v781
    %v942 = vunpack.c.l.b16 %v782
    %v943 = vunpack.c.h.b16 %v782
    %v944 = vunpack.c.l.b16 %v783
    %v945 = vunpack.c.h.b16 %v783
    %v946 = vunpack.c.l.b16 %v784
    %v947 = vunpack.c.h.b16 %v784
    %v948 = vunpack.c.l.b16 %v785
    %v949 = vunpack.c.h.b16 %v785
    %v950 = vunpack.c.l.b16 %v786
    %v951 = vunpack.c.h.b16 %v786
    %v952 = vunpack.c.l.b16 %v787
    %v953 = vunpack.c.h.b16 %v787
    %v954 = vunpack.c.l.b16 %v788
    %v955 = vunpack.c.h.b16 %v788
    %v956 = vunpack.c.l.b16 %v789
    %v957 = vunpack.c.h.b16 %v789
    %v958 = vunpack.c.l.b16 %v790
    %v959 = vunpack.c.h.b16 %v790
    %v960 = vunpack.c.l.b16 %v791
    %v961 = vunpack.c.h.b16 %v791
    %v962 = vunpack.c.l.b16 %v792
    %v963 = vunpack.c.h.b16 %v792
    %v964 = vunpack.c.l.b16 %v793
    %v965 = vunpack.c.h.b16 %v793
    %v966 = vunpack.c.l.b16 %v794
    %v967 = vunpack.c.h.b16 %v794
    %v968 = vunpack.c.l.b16 %v795
    %v969 = vunpack.c.h.b16 %v795
    %v970 = vunpack.c.l.b16 %v796
    %v971 = vunpack.c.h.b16 %v796
    %v972 = vunpack.c.l.b16 %v797
    %v973 = vunpack.c.h.b16 %v797
    %v974 = vunpack.c.l.b16 %v798
    %v975 = vunpack.c.h.b16 %v798
    %v976 = vunpack.c.l.b16 %v799
    %v977 = vunpack.c.h.b16 %v799
    %v978 = vunpack.c.l.b16 %v800
    %v979 = vunpack.c.h.b16 %v800
    %v980 = vunpack.c.l.b16 %v801
    %v981 = vunpack.c.h.b16 %v801
    %v982 = vunpack.c.l.b16 %v802
    %v983 = vunpack.c.h.b16 %v802
    %v984 = vunpack.c.l.b16 %v803
    %v985 = vunpack.c.h.b16 %v803
    %v986 = vunpack.c.l.b16 %v804
    %v987 = vunpack.c.h.b16 %v804
    %v988 = vunpack.c.l.b16 %v805
    %v989 = vunpack.c.h.b16 %v805
    %v990 = vunpack.c.l.b16 %v806
    %v991 = vunpack.c.h.b16 %v806
    %v992 = vunpack.c.l.b16 %v807
    %v993 = vunpack.c.h.b16 %v807
    %v994 = vunpack.c.l.b16 %v808
    %v995 = vunpack.c.h.b16 %v808
    %v996 = vunpack.c.l.b16 %v809
    %v997 = vunpack.c.h.b16 %v809
    %v998 = vunpack.c.l.b16 %v810
    %v999 = vunpack.c.h.b16 %v810
    %v1000 = vunpack.c.l.b16 %v811
    %v1001 = vunpack.c.h.b16 %v811
    %v1002 = vunpack.c.l.b16 %v812
    %v1003 = vunpack.c.h.b16 %v812
    %v1004 = vunpack.c.l.b16 %v813
    %v1005 = vunpack.c.h.b16 %v813
    %v1006 = vunpack.c.l.b16 %v814
    %v1007 = vunpack.c.h.b16 %v814
    %v1008 = vunpack.c.l.b16 %v815
    %v1009 = vunpack.c.h.b16 %v815
    %v1010 = vunpack.c.l.b16 %v816
    %v1011 = vunpack.c.h.b16 %v816
    %v1012 = vunpack.c.l.b16 %v817
    %v1013 = vunpack.c.h.b16 %v817
    %v1014 = vunpack.c.l.b16 %v818
    %v1015 = vunpack.c.h.b16 %v818
    %v1016 = vunpack.c.l.b16 %v819
    %v1017 = vunpack.c.h.b16 %v819
    %v1018 = vunpack.c.l.b16 %v820
    %v1019 = vunpack.c.h.b16 %v820
    %v1020 = vunpack.c.l.b16 %v821
    %v1021 = vunpack.c.h.b16 %v821
    %v1022 = vunpack.c.l.b16 %v822
    %v1023 = vunpack.c.h.b16 %v822
    %v1024 = vunpack.c.l.b16 %v823
    %v1025 = vunpack.c.h.b16 %v823
    %v1026 = vunpack.c.l.b16 %v824
    %v1027 = vunpack.c.h.b16 %v824
    %v1028 = vunpack.c.l.b16 %v825
    %v1029 = vunpack.c.h.b16 %v825
    %v1030 = vpack.c.b16 %v904, %v902
    %v1031 = vpack.c.b16 %v905, %v903
    %v1032 = vpack.c.b16 %v908, %v906
    %v1033 = vpack.c.b16 %v909, %v907
    %v1034 = vpack.c.b16 %v912, %v910
    %v1035 = vpack.c.b16 %v913, %v911
    %v1036 = vpack.c.b16 %v916, %v914
    %v1037 = vpack.c.b16 %v917, %v915
    %v1038 = vpack.c.b16 %v920, %v918
    %v1039 = vpack.c.b16 %v921, %v919
    %v1040 = vpack.c.b16 %v924, %v922
    %v1041 = vpack.c.b16 %v925, %v923
    %v1042 = vpack.c.b16 %v928, %v926
    %v1043 = vpack.c.b16 %v929, %v927
    %v1044 = vpack.c.b16 %v932, %v930
    %v1045 = vpack.c.b16 %v933, %v931
    %v1046 = vpack.c.b16 %v936, %v934
    %v1047 = vpack.c.b16 %v937, %v935
    %v1048 = vpack.c.b16 %v940, %v938
    %v1049 = vpack.c.b16 %v941, %v939
    %v1050 = vpack.c.b16 %v944, %v942
    %v1051 = vpack.c.b16 %v945, %v943
    %v1052 = vpack.c.b16 %v948, %v946
    %v1053 = vpack.c.b16 %v949, %v947
    %v1054 = vpack.c.b16 %v952, %v950
    %v1055 = vpack.c.b16 %v953, %v951
    %v1056 = vpack.c.b16 %v956, %v954
    %v1057 = vpack.c.b16 %v957, %v955
    %v1058 = vpack.c.b16 %v960, %v958
    %v1059 = vpack.c.b16 %v961, %v959
    %v1060 = vpack.c.b16 %v964, %v962
    %v1061 = vpack.c.b16 %v965, %v963
    %v1062 = vpack.c.b16 %v968, %v966
    %v1063 = vpack.c.b16 %v969, %v967
    %v1064 = vpack.c.b16 %v972, %v970
    %v1065 = vpack.c.b16 %v973, %v971
    %v1066 = vpack.c.b16 %v976, %v974
    %v1067 = vpack.c.b16 %v977, %v975
    %v1068 = vpack.c.b16 %v980, %v978
    %v1069 = vpack.c.b16 %v981, %v979
    %v1070 = vpack.c.b16 %v984, %v982
    %v1071 = vpack.c.b16 %v985, %v983
    %v1072 = vpack.c.b16 %v988, %v986
    %v1073 = vpack.c.b16 %v989, %v987
    %v1074 = vpack.c.b16 %v992, %v990
    %v1075 = vpack.c.b16 %v993, %v991
    %v1076 = vpack.c.b16 %v996, %v994
    %v1077 = vpack.c.b16 %v997, %v995
    %v1078 = vpack.c.b16 %v1000, %v998
    %v1079 = vpack.c.b16 %v1001, %v999
    %v1080 = vpack.c.b16 %v1004, %v1002
    %v1081 = vpack.c.b16 %v1005, %v1003
    %v1082 = vpack.c.b16 %v1008, %v1006
    %v1083 = vpack.c.b16 %v1009, %v1007
    %v1084 = vpack.c.b16 %v1012, %v1010
    %v1085 = vpack.c.b16 %v1013, %v1011
    %v1086 = vpack.c.b16 %v1016, %v1014
    %v1087 = vpack.c.b16 %v1017, %v1015
    %v1088 = vpack.c.b16 %v1020, %v1018
    %v1089 = vpack.c.b16 %v1021, %v1019
    %v1090 = vpack.c.b16 %v1024, %v1022
    %v1091 = vpack.c.b16 %v1025, %v1023
    %v1092 = vpack.c.b16 %v1028, %v1026
    %v1093 = vpack.c.b16 %v1029, %v1027
    %1158 = vmatprep.subr.bf16.mxu0 %v1031
    %1159 = vmatpush1.bf16.msra.mxu0 %v1030
    %1160 = vmatprep.subr.bf16.mxu0 %v1033
    %1161 = vmatpush1.bf16.msra.mxu0 %v1032
    %1162 = vmatprep.subr.bf16.mxu0 %v1035
    %1163 = vmatpush1.bf16.msra.mxu0 %v1034
    %1164 = vmatprep.subr.bf16.mxu0 %v1037
    %1165 = vmatpush1.bf16.msra.mxu0 %v1036
    %1166 = vmatprep.subr.bf16.mxu0 %v1039
    %1167 = vmatpush1.bf16.msra.mxu0 %v1038
    %1168 = vmatprep.subr.bf16.mxu0 %v1041
    %1169 = vmatpush1.bf16.msra.mxu0 %v1040
    %1170 = vmatprep.subr.bf16.mxu0 %v1043
    %1171 = vmatpush1.bf16.msra.mxu0 %v1042
    %1172 = vmatprep.subr.bf16.mxu0 %v1045
    %1173 = vmatpush1.bf16.msra.mxu0 %v1044
    %1174 = vmatprep.subr.bf16.mxu0 %v1047
    %1175 = vmatpush1.bf16.msra.mxu0 %v1046
    %1176 = vmatprep.subr.bf16.mxu0 %v1049
    %1177 = vmatpush1.bf16.msra.mxu0 %v1048
    %1178 = vmatprep.subr.bf16.mxu0 %v1051
    %1179 = vmatpush1.bf16.msra.mxu0 %v1050
    %1180 = vmatprep.subr.bf16.mxu0 %v1053
    %1181 = vmatpush1.bf16.msra.mxu0 %v1052
    %1182 = vmatprep.subr.bf16.mxu0 %v1055
    %1183 = vmatpush1.bf16.msra.mxu0 %v1054
    %1184 = vmatprep.subr.bf16.mxu0 %v1057
    %1185 = vmatpush1.bf16.msra.mxu0 %v1056
    %1186 = vmatprep.subr.bf16.mxu0 %v1059
    %1187 = vmatpush1.bf16.msra.mxu0 %v1058
    %1188 = vmatprep.subr.bf16.mxu0 %v1061
    %1189 = vmatpush1.bf16.msra.mxu0 %v1060
    %1190 = vmatprep.mubr.bf16.mxu0 %v759
    %1191 = vmatmul.mubr.bf16.gmra.mrb[0].mxu0 %v758
    %v1192 = vpop.f32.mrb[0].mxu0
    %v1193 = vadd.f32 %v831, %v1192
    %v1194 = vpop.f32.mrb[0].mxu0
    %v1195 = vadd.f32 %v835, %v1194
    %v1196 = vpop.f32.mrb[0].mxu0
    %v1197 = vadd.f32 %v831, %v1196
    %v1198 = vpop.f32.mrb[0].mxu0
    %v1199 = vadd.f32 %v835, %v1198
    %1200 = vdwg.mxu0
    %1201 = vmatprep.subr.bf16.mxu0 %v1063
    %1202 = vmatpush1.bf16.msra.mxu0 %v1062
    %1203 = vmatprep.subr.bf16.mxu0 %v1065
    %1204 = vmatpush1.bf16.msra.mxu0 %v1064
    %1205 = vmatprep.subr.bf16.mxu0 %v1067
    %1206 = vmatpush1.bf16.msra.mxu0 %v1066
    %1207 = vmatprep.subr.bf16.mxu0 %v1069
    %1208 = vmatpush1.bf16.msra.mxu0 %v1068
    %1209 = vmatprep.subr.bf16.mxu0 %v1071
    %1210 = vmatpush1.bf16.msra.mxu0 %v1070
    %1211 = vmatprep.subr.bf16.mxu0 %v1073
    %1212 = vmatpush1.bf16.msra.mxu0 %v1072
    %1213 = vmatprep.subr.bf16.mxu0 %v1075
    %1214 = vmatpush1.bf16.msra.mxu0 %v1074
    %1215 = vmatprep.subr.bf16.mxu0 %v1077
    %1216 = vmatpush1.bf16.msra.mxu0 %v1076
    %1217 = vmatprep.subr.bf16.mxu0 %v1079
    %1218 = vmatpush1.bf16.msra.mxu0 %v1078
    %1219 = vmatprep.subr.bf16.mxu0 %v1081
    %1220 = vmatpush1.bf16.msra.mxu0 %v1080
    %1221 = vmatprep.subr.bf16.mxu0 %v1083
    %1222 = vmatpush1.bf16.msra.mxu0 %v1082
    %1223 = vmatprep.subr.bf16.mxu0 %v1085
    %1224 = vmatpush1.bf16.msra.mxu0 %v1084
    %1225 = vmatprep.subr.bf16.mxu0 %v1087
    %1226 = vmatpush1.bf16.msra.mxu0 %v1086
    %1227 = vmatprep.subr.bf16.mxu0 %v1089
    %1228 = vmatpush1.bf16.msra.mxu0 %v1088
    %1229 = vmatprep.subr.bf16.mxu0 %v1091
    %1230 = vmatpush1.bf16.msra.mxu0 %v1090
    %1231 = vmatprep.subr.bf16.mxu0 %v1093
    %1232 = vmatpush1.bf16.msra.mxu0 %v1092
    %1233 = vmatprep.mubr.bf16.mxu0 %v761
    %1234 = vmatmul.mubr.bf16.gmra.mrb[0].mxu0 %v760
    %v1235 = vpop.f32.mrb[0].mxu0
    %v1236 = vadd.f32 %v1193, %v1235
    %v1237 = vpop.f32.mrb[0].mxu0
    %v1238 = vadd.f32 %v1195, %v1237
    %v1239 = vpop.f32.mrb[0].mxu0
    %v1240 = vadd.f32 %v1197, %v1239
    %v1241 = vpop.f32.mrb[0].mxu0
    %v1242 = vadd.f32 %v1199, %v1241
    %1243 = vdwg.mxu0
    %v1244 = vmul.f32 %v1236, 0.01
    %v1245 = vmul.f32 %v1238, 0.01
    %v1246 = vmul.f32 %v1240, 0.01
    %v1247 = vmul.f32 %v1242, 0.01
    %v1248 = vmax.f32 %v1236, %v1244
    %v1249 = vmax.f32 %v1238, %v1245
    %v1250 = vmax.f32 %v1240, %v1246
    %v1251 = vmax.f32 %v1242, %v1247
    %v1252 = vpack.c.bf16 %v1250, %v1248
    %v1253 = vpack.c.bf16 %v1251, %v1249
    %v1254 = vld [vmem:[#allocation8] sm:$0xf]
    %v1255 = vld [vmem:[#allocation8 + $0x4] sm:$0xf]
    %v1256 = vld [vmem:[#allocation8 + $0x8] sm:$0xf]
    %v1257 = vld [vmem:[#allocation8 + $0xc] sm:$0xf]
    %v1258 = vld [vmem:[#allocation8 + $0x10] sm:$0xf]
    %v1259 = vld [vmem:[#allocation8 + $0x14] sm:$0xf]
    %v1260 = vld [vmem:[#allocation8 + $0x18] sm:$0xf]
    %v1261 = vld [vmem:[#allocation8 + $0x1c] sm:$0xf]
    %v1262 = vld [vmem:[#allocation8 + $0x20] sm:$0xf]
    %v1263 = vld [vmem:[#allocation8 + $0x24] sm:$0xf]
    %v1264 = vld [vmem:[#allocation8 + $0x28] sm:$0xf]
    %v1265 = vld [vmem:[#allocation8 + $0x2c] sm:$0xf]
    %v1266 = vld [vmem:[#allocation8 + $0x30] sm:$0xf]
    %v1267 = vld [vmem:[#allocation8 + $0x34] sm:$0xf]
    %v1268 = vld [vmem:[#allocation8 + $0x38] sm:$0xf]
    %v1269 = vld [vmem:[#allocation8 + $0x3c] sm:$0xf]
    %v1270 = vld [vmem:[#allocation8 + $0x40] sm:$0xf]
    %v1271 = vld [vmem:[#allocation8 + $0x44] sm:$0xf]
    %v1272 = vld [vmem:[#allocation8 + $0x48] sm:$0xf]
    %v1273 = vld [vmem:[#allocation8 + $0x4c] sm:$0xf]
    %v1274 = vld [vmem:[#allocation8 + $0x50] sm:$0xf]
    %v1275 = vld [vmem:[#allocation8 + $0x54] sm:$0xf]
    %v1276 = vld [vmem:[#allocation8 + $0x58] sm:$0xf]
    %v1277 = vld [vmem:[#allocation8 + $0x5c] sm:$0xf]
    %v1278 = vld [vmem:[#allocation8 + $0x60] sm:$0xf]
    %v1279 = vld [vmem:[#allocation8 + $0x64] sm:$0xf]
    %v1280 = vld [vmem:[#allocation8 + $0x68] sm:$0xf]
    %v1281 = vld [vmem:[#allocation8 + $0x6c] sm:$0xf]
    %v1282 = vld [vmem:[#allocation8 + $0x70] sm:$0xf]
    %v1283 = vld [vmem:[#allocation8 + $0x74] sm:$0xf]
    %v1284 = vld [vmem:[#allocation8 + $0x78] sm:$0xf]
    %v1285 = vld [vmem:[#allocation8 + $0x7c] sm:$0xf]
    %v1286 = vld [vmem:[%s6] sm:$0x1]
    %v1288 = vlaneseq
    %v1289 = vshrl.u32 %v1288, 7
    %v1290 = vsub.s32 0, %v1289
    %v1291 = vrot.slane %v1286, %v1290
    %v1325 = vunpack.c.l.b16 %v1254
    %v1326 = vunpack.c.l.b16 %v1255
    %v1327 = vunpack.c.l.b16 %v1256
    %v1328 = vunpack.c.l.b16 %v1257
    %v1329 = vunpack.c.l.b16 %v1258
    %v1330 = vunpack.c.l.b16 %v1259
    %v1331 = vunpack.c.l.b16 %v1260
    %v1332 = vunpack.c.l.b16 %v1261
    %v1333 = vunpack.c.l.b16 %v1262
    %v1334 = vunpack.c.l.b16 %v1263
    %v1335 = vunpack.c.l.b16 %v1264
    %v1336 = vunpack.c.l.b16 %v1265
    %v1337 = vunpack.c.l.b16 %v1266
    %v1338 = vunpack.c.l.b16 %v1267
    %v1339 = vunpack.c.l.b16 %v1268
    %v1340 = vunpack.c.l.b16 %v1269
    %v1341 = vunpack.c.l.b16 %v1270
    %v1342 = vunpack.c.l.b16 %v1271
    %v1343 = vunpack.c.l.b16 %v1272
    %v1344 = vunpack.c.l.b16 %v1273
    %v1345 = vunpack.c.l.b16 %v1274
    %v1346 = vunpack.c.l.b16 %v1275
    %v1347 = vunpack.c.l.b16 %v1276
    %v1348 = vunpack.c.l.b16 %v1277
    %v1349 = vunpack.c.l.b16 %v1278
    %v1350 = vunpack.c.l.b16 %v1279
    %v1351 = vunpack.c.l.b16 %v1280
    %v1352 = vunpack.c.l.b16 %v1281
    %v1353 = vunpack.c.l.b16 %v1282
    %v1354 = vunpack.c.l.b16 %v1283
    %v1355 = vunpack.c.l.b16 %v1284
    %v1356 = vunpack.c.l.b16 %v1285
    %v1357 = vpack.c.b16 %v1326, %v1325
    %v1358 = vpack.c.b16 %v1328, %v1327
    %v1359 = vpack.c.b16 %v1330, %v1329
    %v1360 = vpack.c.b16 %v1332, %v1331
    %v1361 = vpack.c.b16 %v1334, %v1333
    %v1362 = vpack.c.b16 %v1336, %v1335
    %v1363 = vpack.c.b16 %v1338, %v1337
    %v1364 = vpack.c.b16 %v1340, %v1339
    %v1365 = vpack.c.b16 %v1342, %v1341
    %v1366 = vpack.c.b16 %v1344, %v1343
    %v1367 = vpack.c.b16 %v1346, %v1345
    %v1368 = vpack.c.b16 %v1348, %v1347
    %v1369 = vpack.c.b16 %v1350, %v1349
    %v1370 = vpack.c.b16 %v1352, %v1351
    %v1371 = vpack.c.b16 %v1354, %v1353
    %v1372 = vpack.c.b16 %v1356, %v1355
    %1389 = vmatprep.subr.bf16.mxu0 0
    %1390 = vmatpush1.bf16.msra.mxu0 %v1357
    %1391 = vmatprep.subr.bf16.mxu0 0
    %1392 = vmatpush1.bf16.msra.mxu0 %v1358
    %1393 = vmatprep.subr.bf16.mxu0 0
    %1394 = vmatpush1.bf16.msra.mxu0 %v1359
    %1395 = vmatprep.subr.bf16.mxu0 0
    %1396 = vmatpush1.bf16.msra.mxu0 %v1360
    %1397 = vmatprep.subr.bf16.mxu0 0
    %1398 = vmatpush1.bf16.msra.mxu0 %v1361
    %1399 = vmatprep.subr.bf16.mxu0 0
    %1400 = vmatpush1.bf16.msra.mxu0 %v1362
    %1401 = vmatprep.subr.bf16.mxu0 0
    %1402 = vmatpush1.bf16.msra.mxu0 %v1363
    %1403 = vmatprep.subr.bf16.mxu0 0
    %1404 = vmatpush1.bf16.msra.mxu0 %v1364
    %1405 = vmatprep.subr.bf16.mxu0 0
    %1406 = vmatpush1.bf16.msra.mxu0 %v1365
    %1407 = vmatprep.subr.bf16.mxu0 0
    %1408 = vmatpush1.bf16.msra.mxu0 %v1366
    %1409 = vmatprep.subr.bf16.mxu0 0
    %1410 = vmatpush1.bf16.msra.mxu0 %v1367
    %1411 = vmatprep.subr.bf16.mxu0 0
    %1412 = vmatpush1.bf16.msra.mxu0 %v1368
    %1413 = vmatprep.subr.bf16.mxu0 0
    %1414 = vmatpush1.bf16.msra.mxu0 %v1369
    %1415 = vmatprep.subr.bf16.mxu0 0
    %1416 = vmatpush1.bf16.msra.mxu0 %v1370
    %1417 = vmatprep.subr.bf16.mxu0 0
    %1418 = vmatpush1.bf16.msra.mxu0 %v1371
    %1419 = vmatprep.subr.bf16.mxu0 0
    %1420 = vmatpush1.bf16.msra.mxu0 %v1372
    %1421 = vmatprep.mubr.bf16.mxu0 %v1253
    %1422 = vmatmul.mubr.bf16.gmra.mrb[0].mxu0 %v1252
    %v1423 = vpop.f32.mrb[0].mxu0
    %v1424 = vadd.f32 %v1291, %v1423
    %v1425 = vpop.f32.mrb[0].mxu0
    %v1426 = vpop.f32.mrb[0].mxu0
    %v1427 = vadd.f32 %v1291, %v1426
    %v1428 = vpop.f32.mrb[0].mxu0
    %1429 = vdwg.mxu0
    %v1430 = vmul.f32 %v1424, 0.01
    %v1431 = vmul.f32 %v1427, 0.01
    %v1432 = vmax.f32 %v1424, %v1430
    %v1433 = vmax.f32 %v1427, %v1431
    %v1434 = vpack.c.bf16 %v1433, %v1432
    %v1435 = vld [vmem:[#allocation10] sm:$0xf]
    %v1436 = vld [vmem:[#allocation10 + $0x4] sm:$0xf]
    %v1437 = vld [vmem:[#allocation10 + $0x8] sm:$0xf]
    %v1438 = vld [vmem:[#allocation10 + $0xc] sm:$0xf]
    %v1439 = vld [vmem:[#allocation10 + $0x10] sm:$0xf]
    %v1440 = vld [vmem:[#allocation10 + $0x14] sm:$0xf]
    %v1441 = vld [vmem:[#allocation10 + $0x18] sm:$0xf]
    %v1442 = vld [vmem:[#allocation10 + $0x1c] sm:$0xf]
    %v1443 = vld [vmem:[#allocation10 + $0x20] sm:$0xf]
    %v1444 = vld [vmem:[#allocation10 + $0x24] sm:$0xf]
    %v1445 = vld [vmem:[#allocation10 + $0x28] sm:$0xf]
    %v1446 = vld [vmem:[#allocation10 + $0x2c] sm:$0xf]
    %v1447 = vld [vmem:[#allocation10 + $0x30] sm:$0xf]
    %v1448 = vld [vmem:[#allocation10 + $0x34] sm:$0xf]
    %v1449 = vld [vmem:[#allocation10 + $0x38] sm:$0xf]
    %v1450 = vld [vmem:[#allocation10 + $0x3c] sm:$0xf]
    %v1451 = vld [vmem:[%s8] sm:$0x1]
    %v1453 = vlaneseq
    %v1454 = vshrl.u32 %v1453, 7
    %v1455 = vsub.s32 0, %v1454
    %v1456 = vrot.slane %v1451, %v1455
    %v1474 = vunpack.c.l.b16 %v1435
    %v1475 = vunpack.c.l.b16 %v1436
    %v1476 = vunpack.c.l.b16 %v1437
    %v1477 = vunpack.c.l.b16 %v1438
    %v1478 = vunpack.c.l.b16 %v1439
    %v1479 = vunpack.c.l.b16 %v1440
    %v1480 = vunpack.c.l.b16 %v1441
    %v1481 = vunpack.c.l.b16 %v1442
    %v1482 = vunpack.c.l.b16 %v1443
    %v1483 = vunpack.c.l.b16 %v1444
    %v1484 = vunpack.c.l.b16 %v1445
    %v1485 = vunpack.c.l.b16 %v1446
    %v1486 = vunpack.c.l.b16 %v1447
    %v1487 = vunpack.c.l.b16 %v1448
    %v1488 = vunpack.c.l.b16 %v1449
    %v1489 = vunpack.c.l.b16 %v1450
    %v1490 = vpack.c.b16 %v1475, %v1474
    %v1491 = vpack.c.b16 %v1477, %v1476
    %v1492 = vpack.c.b16 %v1479, %v1478
    %v1493 = vpack.c.b16 %v1481, %v1480
    %v1494 = vpack.c.b16 %v1483, %v1482
    %v1495 = vpack.c.b16 %v1485, %v1484
    %v1496 = vpack.c.b16 %v1487, %v1486
    %v1497 = vpack.c.b16 %v1489, %v1488
    %1506 = vmatprep.subr.bf16.mxu0 0
    %1507 = vmatpush1.bf16.msra.mxu0 %v1490
    %1508 = vmatprep.subr.bf16.mxu0 0
    %1509 = vmatpush1.bf16.msra.mxu0 %v1491
    %1510 = vmatprep.subr.bf16.mxu0 0
    %1511 = vmatpush1.bf16.msra.mxu0 %v1492
    %1512 = vmatprep.subr.bf16.mxu0 0
    %1513 = vmatpush1.bf16.msra.mxu0 %v1493
    %1514 = vmatprep.subr.bf16.mxu0 0
    %1515 = vmatpush1.bf16.msra.mxu0 %v1494
    %1516 = vmatprep.subr.bf16.mxu0 0
    %1517 = vmatpush1.bf16.msra.mxu0 %v1495
    %1518 = vmatprep.subr.bf16.mxu0 0
    %1519 = vmatpush1.bf16.msra.mxu0 %v1496
    %1520 = vmatprep.subr.bf16.mxu0 0
    %1521 = vmatpush1.bf16.msra.mxu0 %v1497
    %1522 = vmatprep.subr.bf16.mxu0 0
    %1523 = vmatpush1.bf16.msra.mxu0 0
    %1524 = vmatprep.subr.bf16.mxu0 0
    %1525 = vmatpush1.bf16.msra.mxu0 0
    %1526 = vmatprep.subr.bf16.mxu0 0
    %1527 = vmatpush1.bf16.msra.mxu0 0
    %1528 = vmatprep.subr.bf16.mxu0 0
    %1529 = vmatpush1.bf16.msra.mxu0 0
    %1530 = vmatprep.subr.bf16.mxu0 0
    %1531 = vmatpush1.bf16.msra.mxu0 0
    %1532 = vmatprep.subr.bf16.mxu0 0
    %1533 = vmatpush1.bf16.msra.mxu0 0
    %1534 = vmatprep.subr.bf16.mxu0 0
    %1535 = vmatpush1.bf16.msra.mxu0 0
    %1536 = vmatprep.subr.bf16.mxu0 0
    %1537 = vmatpush1.bf16.msra.mxu0 0
    %1538 = vmatprep.mubr.bf16.mxu0 0
    %1539 = vmatmul.mubr.bf16.gmra.mrb[0].mxu0 %v1434
    %v1540 = vpop.f32.mrb[0].mxu0
    %v1541 = vadd.f32 %v1456, %v1540
    %v1542 = vpop.f32.mrb[0].mxu0
    %v1543 = vpop.f32.mrb[0].mxu0
    %v1544 = vadd.f32 %v1456, %v1543
    %v1545 = vpop.f32.mrb[0].mxu0
    %1546 = vdwg.mxu0
    %v1547 = vpack.c.bf16 %v1544, %v1541
    %v1549 = vunpack.c.l.b16 %v1547
    %v1550 = vunpack.c.h.b16 %v1547
    %v1551 = vpack.c.b16 %v1549, %v1549
    %v1552 = vpack.c.b16 %v1550, %v1550
    %1555 = vst [vmem:[#allocation11] sm:$0xf] %v1551
    %1556 = vst [vmem:[#allocation11 + $0x4] sm:$0xf] %v1552
    // Predicated region
    $region58: #{tpu_custom_call.1} parent=1 // pred_check
      _
    $region59: #{tpu_custom_call.1} parent=1 // pred_check_branch
      %1558 = sbr.rel (0) target = $region61
    $region60: #{tpu_custom_call.1} parent=1 // pred_region
      %s1560 = ssub.s32 128, 128
      %1561 = vsyncadd [#allocation4], %s1560
      %s1562 = sshll.u32 [#allocation11], 4
      %s1563 = int_to_ptr.vmem [resolvable:$true] %s1562
      %1568 = dma.vmem_to_hbm [thread:$0]  %s1563, 128, %s9, [#allocation4], 64, 64, 4
    $region61: #{tpu_custom_call.1} parent=1 // pred_fallthru
      _
    // Predicated region
    $region62: #{tpu_custom_call.1} parent=1 // pred_check
      _
    $region63: #{tpu_custom_call.1} parent=1 // pred_check_branch
      %1570 = sbr.rel (0) target = $region65
    $region64: #{tpu_custom_call.1} parent=1 // pred_region
      %1571 = dma.done [#allocation4], 128
    $region65: #{tpu_custom_call.1} parent=1 // pred_fallthru
      _
    %1572 = vsyncpa [#allocation3], 1
    %1573 = vsyncpa [#allocation6], 1
    %1574 = vsyncpa [#allocation9], 1
    %1575 = vsyncpa [#allocation4], 1

</llo_original>
